<compile_context>
chip_gen: v7x
topology: tpu7x:2x2x1
jax: 0.10.0
libtpu: 0.0.40
codegen_flags: <defaults>
</compile_context>

<pallas_src>
import jax
import jax.numpy as jnp
from jax.experimental import pallas as pl
from jax.experimental.pallas import tpu as pltpu


def _round_up(n, m):
    return ((n + m - 1) // m) * m


def decoder_kernel(x_ref, w1_ref, b1_ref, w2_ref, b2_ref, w3_ref, b3_ref, o_ref):
    # Layer 0: Linear + ReLU (bf16 operands, f32 accumulation / elementwise)
    h = jnp.dot(x_ref[...], w1_ref[...], preferred_element_type=jnp.float32)
    h = jnp.maximum(h + b1_ref[...], 0.0)
    # Layer 1: Linear + ReLU
    h = jnp.dot(h.astype(w2_ref.dtype), w2_ref[...],
                preferred_element_type=jnp.float32)
    h = jnp.maximum(h + b2_ref[...], 0.0)
    # Layer 2: Linear (no activation)
    o_ref[...] = (
        jnp.dot(h.astype(w3_ref.dtype), w3_ref[...],
                preferred_element_type=jnp.float32)
        + b3_ref[...]
    ).astype(o_ref.dtype)


def decoder_forward(x, params, *, tm=256, compute_dtype=jnp.bfloat16):
    """x: (bs, k) float32.  params: list of (W, b) with W=(in, out), b=(1, out)."""
    (w1, b1), (w2, b2), (w3, b3) = params
    bs, k = x.shape
    h1 = w1.shape[1]
    h2 = w2.shape[1]
    out_dim = w3.shape[1]

    # Batch tile: multiple of 8 sublanes, never larger than the (padded) batch.
    tm_eff = min(tm, _round_up(bs, 8))
    bs_pad = _round_up(bs, tm_eff)
    if bs_pad != bs:
        x = jnp.pad(x, ((0, bs_pad - bs), (0, 0)))
    num_tiles = bs_pad // tm_eff

    # bf16 weights/activations; biases stay f32 for the f32 bias-add + ReLU.
    xc = x.astype(compute_dtype)
    w1c, w2c, w3c = (w.astype(compute_dtype) for w in (w1, w2, w3))
    b1c, b2c, b3c = (b.astype(jnp.float32) for b in (b1, b2, b3))

    flops = 2 * bs_pad * (k * h1 + h1 * h2 + h2 * out_dim)
    bytes_accessed = (
        xc.size * xc.dtype.itemsize
        + sum(a.size * a.dtype.itemsize for a in (w1c, w2c, w3c, b1c, b2c, b3c))
        + bs_pad * out_dim * 4
    )

    grid_spec = pltpu.PrefetchScalarGridSpec(
        num_scalar_prefetch=0,
        grid=(num_tiles,),
        in_specs=[
            # Activations: tiled over batch, auto double-buffered.
            pl.BlockSpec((tm_eff, k), lambda i: (i, 0)),
            # Weights/biases: same block every step -> fetched once, VMEM-resident.
            pl.BlockSpec((k, h1), lambda i: (0, 0)),
            pl.BlockSpec((1, h1), lambda i: (0, 0)),
            pl.BlockSpec((h1, h2), lambda i: (0, 0)),
            pl.BlockSpec((1, h2), lambda i: (0, 0)),
            pl.BlockSpec((h2, out_dim), lambda i: (0, 0)),
            pl.BlockSpec((1, out_dim), lambda i: (0, 0)),
        ],
        out_specs=pl.BlockSpec((tm_eff, out_dim), lambda i: (i, 0)),
    )

    out = pl.pallas_call(
        decoder_kernel,
        out_shape=jax.ShapeDtypeStruct((bs_pad, out_dim), jnp.float32),
        grid_spec=grid_spec,
        compiler_params=pltpu.CompilerParams(
            dimension_semantics=(("parallel",) if num_tiles > 1 else ("arbitrary",)),
        ),
        cost_estimate=pl.CostEstimate(
            flops=flops, transcendentals=0, bytes_accessed=bytes_accessed
        ),
    )(xc, w1c, b1c, w2c, b2c, w3c, b3c)

    out = out[:bs]
    # x = x.view(bs, 3, -1)
    return out.reshape(bs, 3, -1)


def make_params(key, k, layer_sizes):
    """Deterministic synthetic weights matching nn.Linear shapes, stored (in, out)."""
    params = []
    in_c = k
    for out_c in layer_sizes:
        key, kw, kb = jax.random.split(key, 3)
        scale = 1.0 / jnp.sqrt(jnp.float32(in_c))
        w = jax.random.uniform(kw, (in_c, out_c), jnp.float32, -scale, scale)
        b = jax.random.uniform(kb, (1, out_c), jnp.float32, -scale, scale)
        params.append((w, b))
        in_c = out_c
    return params


def decoder_reference(x, params, compute_dtype=jnp.bfloat16):
    """Mirrors the kernel numerics (bf16 operands, f32 accumulate/elementwise)."""
    h = x
    n = len(params)
    for i, (w, b) in enumerate(params):
        h = jnp.dot(h.astype(compute_dtype), w.astype(compute_dtype),
                    preferred_element_type=jnp.float32) + b.astype(jnp.float32)
        if i < n - 1:
            h = jnp.maximum(h, 0.0)
    return h.reshape(x.shape[0], 3, -1)


if __name__ == "__main__":
    # Small, TPU-friendly shapes consistent with the module:
    # Decoder(k=256, layer_sizes=[256, 256, 3 * 256]).
    k = 256
    layer_sizes = [256, 256, 3 * 256]

    key = jax.random.PRNGKey(0)
    key, kp = jax.random.split(key)
    params = make_params(kp, k, layer_sizes)

    # Case 1: ragged batch spanning multiple grid tiles (tests tiling + padding).
    bs = 52
    key, kx = jax.random.split(key)
    x = jax.random.normal(kx, (bs, k), dtype=jnp.float32)
    out = jax.block_until_ready(decoder_forward(x, params, tm=32))
    ref = decoder_reference(x, params)
    assert out.shape == (bs, 3, layer_sizes[-1] // 3), out.shape
    assert jnp.allclose(out, ref, atol=1e-3, rtol=1e-3), "mismatch vs reference (bs=52)"

    # Case 2: tiny batch (single padded tile), default tile size.
    bs2 = 4
    key, kx2 = jax.random.split(key)
    x2 = jax.random.normal(kx2, (bs2, k), dtype=jnp.float32)
    out2 = jax.block_until_ready(decoder_forward(x2, params))
    ref2 = decoder_reference(x2, params)
    assert out2.shape == (bs2, 3, layer_sizes[-1] // 3), out2.shape
    assert jnp.allclose(out2, ref2, atol=1e-3, rtol=1e-3), "mismatch vs reference (bs=4)"

    print("KERNEL_OK")
</pallas_src>

<mosaic_0001>
module attributes {stable_mosaic.version = 11 : i64} {
  func.func @decoder_kernel(%arg0: i32, %arg1: memref<32x256xbf16, #tpu.memory_space<vmem>>, %arg2: memref<256x256xbf16, #tpu.memory_space<vmem>>, %arg3: memref<1x256xf32, #tpu.memory_space<vmem>>, %arg4: memref<256x256xbf16, #tpu.memory_space<vmem>>, %arg5: memref<1x256xf32, #tpu.memory_space<vmem>>, %arg6: memref<256x768xbf16, #tpu.memory_space<vmem>>, %arg7: memref<1x768xf32, #tpu.memory_space<vmem>>, %arg8: memref<32x768xf32, #tpu.memory_space<vmem>>) attributes {dimension_semantics = [#tpu.dimension_semantics<parallel>], iteration_bounds = array<i64: 2>, scalar_prefetch = 0 : i64, scratch_operands = 0 : i64, tpu.core_type = #tpu.core_type<tc>, window_params = [{transform_indices = @transform_0, window_bounds = array<i64: 32, 256>}, {pipeline_mode = #tpu.pipeline_mode<synchronous>, transform_indices = @transform_1, window_bounds = array<i64: 256, 256>}, {pipeline_mode = #tpu.pipeline_mode<synchronous>, transform_indices = @transform_2, window_bounds = array<i64: 1, 256>}, {pipeline_mode = #tpu.pipeline_mode<synchronous>, transform_indices = @transform_3, window_bounds = array<i64: 256, 256>}, {pipeline_mode = #tpu.pipeline_mode<synchronous>, transform_indices = @transform_4, window_bounds = array<i64: 1, 256>}, {pipeline_mode = #tpu.pipeline_mode<synchronous>, transform_indices = @transform_5, window_bounds = array<i64: 256, 768>}, {pipeline_mode = #tpu.pipeline_mode<synchronous>, transform_indices = @transform_6, window_bounds = array<i64: 1, 768>}, {transform_indices = @transform_7, window_bounds = array<i64: 32, 768>}]} {
    %c0 = arith.constant 0 : index
    %c0_0 = arith.constant 0 : index
    %0 = vector.load %arg1[%c0, %c0_0] : memref<32x256xbf16, #tpu.memory_space<vmem>>, vector<32x256xbf16>
    %c0_1 = arith.constant 0 : index
    %c0_2 = arith.constant 0 : index
    %1 = vector.load %arg2[%c0_1, %c0_2] : memref<256x256xbf16, #tpu.memory_space<vmem>>, vector<256x256xbf16>
    %cst = arith.constant dense<0.000000e+00> : vector<32x256xf32>
    %2 = tpu.matmul %0, %1, %cst {dimension_numbers = #tpu.dot_dimension_numbers<[1], [0], [0], [1], [0, 0, 1, 1], [], []>} : vector<32x256xbf16>, vector<256x256xbf16>, vector<32x256xf32> -> vector<32x256xf32>
    %c0_3 = arith.constant 0 : index
    %c0_4 = arith.constant 0 : index
    %3 = vector.load %arg3[%c0_3, %c0_4] : memref<1x256xf32, #tpu.memory_space<vmem>>, vector<1x256xf32>
    %4 = vector.broadcast %3 : vector<1x256xf32> to vector<32x256xf32>
    %5 = arith.addf %2, %4 : vector<32x256xf32>
    %cst_5 = arith.constant 0.000000e+00 : f32
    %6 = vector.broadcast %cst_5 : f32 to vector<32x256xf32>
    %7 = arith.maximumf %5, %6 : vector<32x256xf32>
    %8 = arith.truncf %7 : vector<32x256xf32> to vector<32x256xbf16>
    %c0_6 = arith.constant 0 : index
    %c0_7 = arith.constant 0 : index
    %9 = vector.load %arg4[%c0_6, %c0_7] : memref<256x256xbf16, #tpu.memory_space<vmem>>, vector<256x256xbf16>
    %cst_8 = arith.constant dense<0.000000e+00> : vector<32x256xf32>
    %10 = tpu.matmul %8, %9, %cst_8 {dimension_numbers = #tpu.dot_dimension_numbers<[1], [0], [0], [1], [0, 0, 1, 1], [], []>} : vector<32x256xbf16>, vector<256x256xbf16>, vector<32x256xf32> -> vector<32x256xf32>
    %c0_9 = arith.constant 0 : index
    %c0_10 = arith.constant 0 : index
    %11 = vector.load %arg5[%c0_9, %c0_10] : memref<1x256xf32, #tpu.memory_space<vmem>>, vector<1x256xf32>
    %12 = vector.broadcast %11 : vector<1x256xf32> to vector<32x256xf32>
    %13 = arith.addf %10, %12 : vector<32x256xf32>
    %cst_11 = arith.constant 0.000000e+00 : f32
    %14 = vector.broadcast %cst_11 : f32 to vector<32x256xf32>
    %15 = arith.maximumf %13, %14 : vector<32x256xf32>
    %16 = arith.truncf %15 : vector<32x256xf32> to vector<32x256xbf16>
    %c0_12 = arith.constant 0 : index
    %c0_13 = arith.constant 0 : index
    %17 = vector.load %arg6[%c0_12, %c0_13] : memref<256x768xbf16, #tpu.memory_space<vmem>>, vector<256x768xbf16>
    %cst_14 = arith.constant dense<0.000000e+00> : vector<32x768xf32>
    %18 = tpu.matmul %16, %17, %cst_14 {dimension_numbers = #tpu.dot_dimension_numbers<[1], [0], [0], [1], [0, 0, 1, 1], [], []>} : vector<32x256xbf16>, vector<256x768xbf16>, vector<32x768xf32> -> vector<32x768xf32>
    %c0_15 = arith.constant 0 : index
    %c0_16 = arith.constant 0 : index
    %19 = vector.load %arg7[%c0_15, %c0_16] : memref<1x768xf32, #tpu.memory_space<vmem>>, vector<1x768xf32>
    %20 = vector.broadcast %19 : vector<1x768xf32> to vector<32x768xf32>
    %21 = arith.addf %18, %20 : vector<32x768xf32>
    %c0_17 = arith.constant 0 : index
    %c0_18 = arith.constant 0 : index
    %22 = vector.load %arg8[%c0_17, %c0_18] : memref<32x768xf32, #tpu.memory_space<vmem>>, vector<32x768xf32>
    tpu.vector_store %arg8[%c0_17, %c0_18], %21 {strides = array<i32>} : memref<32x768xf32, #tpu.memory_space<vmem>>, vector<32x768xf32>,
    return
  }
  func.func @transform_0(%arg0: i32) -> (i32, i32) {
    %c0_i32 = arith.constant 0 : i32
    %c0_i32_0 = arith.constant 0 : i32
    return %arg0, %c0_i32 : i32, i32
  }
  func.func @transform_1(%arg0: i32) -> (i32, i32) {
    %c0_i32 = arith.constant 0 : i32
    %c0_i32_0 = arith.constant 0 : i32
    %c0_i32_1 = arith.constant 0 : i32
    return %c0_i32, %c0_i32_0 : i32, i32
  }
  func.func @transform_2(%arg0: i32) -> (i32, i32) {
    %c0_i32 = arith.constant 0 : i32
    %c0_i32_0 = arith.constant 0 : i32
    %c0_i32_1 = arith.constant 0 : i32
    return %c0_i32, %c0_i32_0 : i32, i32
  }
  func.func @transform_3(%arg0: i32) -> (i32, i32) {
    %c0_i32 = arith.constant 0 : i32
    %c0_i32_0 = arith.constant 0 : i32
    %c0_i32_1 = arith.constant 0 : i32
    return %c0_i32, %c0_i32_0 : i32, i32
  }
  func.func @transform_4(%arg0: i32) -> (i32, i32) {
    %c0_i32 = arith.constant 0 : i32
    %c0_i32_0 = arith.constant 0 : i32
    %c0_i32_1 = arith.constant 0 : i32
    return %c0_i32, %c0_i32_0 : i32, i32
  }
  func.func @transform_5(%arg0: i32) -> (i32, i32) {
    %c0_i32 = arith.constant 0 : i32
    %c0_i32_0 = arith.constant 0 : i32
    %c0_i32_1 = arith.constant 0 : i32
    return %c0_i32, %c0_i32_0 : i32, i32
  }
  func.func @transform_6(%arg0: i32) -> (i32, i32) {
    %c0_i32 = arith.constant 0 : i32
    %c0_i32_0 = arith.constant 0 : i32
    %c0_i32_1 = arith.constant 0 : i32
    return %c0_i32, %c0_i32_0 : i32, i32
  }
  func.func @transform_7(%arg0: i32) -> (i32, i32) {
    %c0_i32 = arith.constant 0 : i32
    %c0_i32_0 = arith.constant 0 : i32
    return %arg0, %c0_i32 : i32, i32
  }
}

</mosaic_0001>

<llo_original>
// kernel: tpu_custom_call.1
$region0: #{tpu_custom_call.1}
  #allocation0 [shape = 'u32[]', space=smem, size = 0x4, offset = 0x4, fixed_abs, tag = 'smem constant byte address 0x4 - core index']
  #allocation1 [shape = 'u32[144,128]{1,0:T(1,128)}', space=vmem, size = 0x12000, scoped, tag = 'internal scratch']
  %s0 = inlined_call_operand.hbm [shape: bf16[64,256], index: 0, kind: input, shape index: {}]
  %s1 = inlined_call_operand.hbm [shape: bf16[256,256], index: 1, kind: input, shape index: {}]
  %s2 = inlined_call_operand.vmem [shape: f32[1,256], index: 2, kind: input, shape index: {}]
  %s3 = inlined_call_operand.hbm [shape: bf16[256,256], index: 3, kind: input, shape index: {}]
  %s4 = inlined_call_operand.vmem [shape: f32[1,256], index: 4, kind: input, shape index: {}]
  %s5 = inlined_call_operand.hbm [shape: bf16[256,768], index: 5, kind: input, shape index: {}]
  %s6 = inlined_call_operand.vmem [shape: f32[1,768], index: 6, kind: input, shape index: {}]
  %s7 = inlined_call_operand.hbm [shape: f32[64,768], index: 7, kind: output, shape index: {}]
  %s8 = sld [smem:[#allocation0]]
  $region77: #{tpu_custom_call.1} parent=0
    _
  %s10 = ssub.s32 1, %s8
  %s11 = scalar_select 0, %s10, %s8
  $region1: #{tpu_custom_call.1} parent=0
    #allocation2 [shape = 'u8[32768]{0}', space=vmem, size = 0x8000, scoped, tag = 'input window, operand 0']
    #allocation3 [shape = 's32[2]{0}', space=sflag, size = 0x8, scoped, tag = 'scoped memory for tpu_custom_call.1']
    #allocation4 [shape = 's32[2]{0}', space=sflag, size = 0x8, scoped, tag = 'scoped memory for tpu_custom_call.1']
    #allocation5 [shape = 'u8[131072]{0}', space=vmem, size = 0x20000, scoped, tag = 'input window, operand 1, single buffered']
    #allocation6 [shape = 's32[1]{0}', space=sflag, size = 0x4, scoped, tag = 'scoped memory for tpu_custom_call.1']
    #allocation7 [shape = 'u8[131072]{0}', space=vmem, size = 0x20000, scoped, tag = 'input window, operand 3, single buffered']
    #allocation8 [shape = 'u8[393216]{0}', space=vmem, size = 0x60000, scoped, tag = 'input window, operand 5, single buffered']
    #allocation9 [shape = 's32[1]{0}', space=sflag, size = 0x4, scoped, tag = 'scoped memory for tpu_custom_call.1']
    #allocation10 [shape = 'u8[196608]{0}', space=vmem, size = 0x30000, scoped, tag = 'output window, operand 0']
    %12 = vsyncpa [#allocation3], 0
    %s13 = scalar_lea.sflag [#allocation3], 1
    %14 = vsyncpa %s13, 0
    %15 = vsyncpa [#allocation6], 0
    %16 = vsyncpa [#allocation9], 0
    %17 = vsyncpa [#allocation4], 0
    %s18 = scalar_lea.sflag [#allocation4], 1
    %19 = vsyncpa %s18, 0
    loop: start=0, step=1, limit=4
    $region2: #{tpu_custom_call.1} parent=1 // loop_pre_header
      _
    $region3: #{tpu_custom_call.1} parent=1 // loop_header
      %s21 = sphi 0, %s25
      %p22 = scmp.ge.s32.totalorder %s21, 4
      %s31 = sphi 0, %s33
      %s34 = sphi 0, %s31
      %s35 = sphi 0, %s34
      %s51 = sphi 0, %s35
      %s55 = sphi 0, %s55
      %s57 = sphi 0, %s55
      %s58 = sphi 0, %s57
      %s72 = sphi 0, %s58
      %s76 = sphi 0, %s76
      %s78 = sphi 0, %s76
      %s79 = sphi 0, %s78
      %s93 = sphi 0, %s79
      %s97 = sphi 0, %s97
      %s99 = sphi 0, %s97
      %s100 = sphi 0, %s99
      %s114 = sphi 0, %s100
      %s118 = sphi 0, %s118
      %s120 = sphi 0, %s118
      %s121 = sphi 0, %s120
      %s135 = sphi 0, %s121
      %s139 = sphi 0, %s139
      %s141 = sphi 0, %s139
      %s142 = sphi 0, %s141
      %s156 = sphi 0, %s142
      %s160 = sphi 0, %s160
      %s162 = sphi 0, %s160
      %s163 = sphi 0, %s162
      %s177 = sphi 0, %s163
      %s183 = sphi 0, %s185
      %s186 = sphi 0, %s183
      %s187 = sphi 0, %s186
      %s203 = sphi 0, %s187
    $region4: #{tpu_custom_call.1} parent=1 // loop_header_branch
      %24 = sbr.rel (%p22) target = $region8
    $region5: #{tpu_custom_call.1} parent=1 // loop_body
      %s26 = ssub.s32 %s21, 1
      %s27 = ssub.s32 %s21, 2
      %s28 = sadd.s32 %s21, 1
      %s29 = ssub.s32 %s21, %s28
      %p30 = scmp.eq.s32.totalorder %s29, 0
      %s32 = sadd.s32 %s31, 1
      %s33 = scalar_select %p30, %s31, %s32
      %p36 = pneg %p30
      %p37 = scmp.eq.s32.totalorder %s21, 1
      %p38 = por %p36, %p37
      %p39 = scmp.ne.s32.totalorder %s31, %s34
      %p40 = scmp.eq.s32.totalorder %s21, 0
      %p41 = por %p39, %p40
      %p42 = scmp.ne.s32.totalorder %s31, %s34
      %p43 = scmp.eq.s32.totalorder %s26, 1
      %p44 = por %p42, %p43
      %p45 = scmp.ne.s32.totalorder %s34, %s35
      %p46 = scmp.eq.s32.totalorder %s26, 0
      %p47 = por %p45, %p46
      %p48 = scmp.ne.s32.totalorder %s34, %s35
      %p49 = scmp.eq.s32.totalorder %s27, 1
      %p50 = por %p48, %p49
      %p52 = scmp.ne.s32.totalorder %s35, %s51
      %p53 = scmp.eq.s32.totalorder %s27, 0
      %p54 = por %p52, %p53
      %s56 = sadd.s32 %s55, 1
      %p59 = scmp.eq.s32.totalorder %s21, 1
      %p60 = scmp.ne.s32.totalorder %s55, %s57
      %p61 = scmp.eq.s32.totalorder %s21, 0
      %p62 = por %p60, %p61
      %p63 = scmp.ne.s32.totalorder %s55, %s57
      %p64 = scmp.eq.s32.totalorder %s26, 1
      %p65 = por %p63, %p64
      %p66 = scmp.ne.s32.totalorder %s57, %s58
      %p67 = scmp.eq.s32.totalorder %s26, 0
      %p68 = por %p66, %p67
      %p69 = scmp.ne.s32.totalorder %s57, %s58
      %p70 = scmp.eq.s32.totalorder %s27, 1
      %p71 = por %p69, %p70
      %p73 = scmp.ne.s32.totalorder %s58, %s72
      %p74 = scmp.eq.s32.totalorder %s27, 0
      %p75 = por %p73, %p74
      %s77 = sadd.s32 %s76, 1
      %p80 = scmp.eq.s32.totalorder %s21, 1
      %p81 = scmp.ne.s32.totalorder %s76, %s78
      %p82 = scmp.eq.s32.totalorder %s21, 0
      %p83 = por %p81, %p82
      %p84 = scmp.ne.s32.totalorder %s76, %s78
      %p85 = scmp.eq.s32.totalorder %s26, 1
      %p86 = por %p84, %p85
      %p87 = scmp.ne.s32.totalorder %s78, %s79
      %p88 = scmp.eq.s32.totalorder %s26, 0
      %p89 = por %p87, %p88
      %p90 = scmp.ne.s32.totalorder %s78, %s79
      %p91 = scmp.eq.s32.totalorder %s27, 1
      %p92 = por %p90, %p91
      %p94 = scmp.ne.s32.totalorder %s79, %s93
      %p95 = scmp.eq.s32.totalorder %s27, 0
      %p96 = por %p94, %p95
      %s98 = sadd.s32 %s97, 1
      %p101 = scmp.eq.s32.totalorder %s21, 1
      %p102 = scmp.ne.s32.totalorder %s97, %s99
      %p103 = scmp.eq.s32.totalorder %s21, 0
      %p104 = por %p102, %p103
      %p105 = scmp.ne.s32.totalorder %s97, %s99
      %p106 = scmp.eq.s32.totalorder %s26, 1
      %p107 = por %p105, %p106
      %p108 = scmp.ne.s32.totalorder %s99, %s100
      %p109 = scmp.eq.s32.totalorder %s26, 0
      %p110 = por %p108, %p109
      %p111 = scmp.ne.s32.totalorder %s99, %s100
      %p112 = scmp.eq.s32.totalorder %s27, 1
      %p113 = por %p111, %p112
      %p115 = scmp.ne.s32.totalorder %s100, %s114
      %p116 = scmp.eq.s32.totalorder %s27, 0
      %p117 = por %p115, %p116
      %s119 = sadd.s32 %s118, 1
      %p122 = scmp.eq.s32.totalorder %s21, 1
      %p123 = scmp.ne.s32.totalorder %s118, %s120
      %p124 = scmp.eq.s32.totalorder %s21, 0
      %p125 = por %p123, %p124
      %p126 = scmp.ne.s32.totalorder %s118, %s120
      %p127 = scmp.eq.s32.totalorder %s26, 1
      %p128 = por %p126, %p127
      %p129 = scmp.ne.s32.totalorder %s120, %s121
      %p130 = scmp.eq.s32.totalorder %s26, 0
      %p131 = por %p129, %p130
      %p132 = scmp.ne.s32.totalorder %s120, %s121
      %p133 = scmp.eq.s32.totalorder %s27, 1
      %p134 = por %p132, %p133
      %p136 = scmp.ne.s32.totalorder %s121, %s135
      %p137 = scmp.eq.s32.totalorder %s27, 0
      %p138 = por %p136, %p137
      %s140 = sadd.s32 %s139, 1
      %p143 = scmp.eq.s32.totalorder %s21, 1
      %p144 = scmp.ne.s32.totalorder %s139, %s141
      %p145 = scmp.eq.s32.totalorder %s21, 0
      %p146 = por %p144, %p145
      %p147 = scmp.ne.s32.totalorder %s139, %s141
      %p148 = scmp.eq.s32.totalorder %s26, 1
      %p149 = por %p147, %p148
      %p150 = scmp.ne.s32.totalorder %s141, %s142
      %p151 = scmp.eq.s32.totalorder %s26, 0
      %p152 = por %p150, %p151
      %p153 = scmp.ne.s32.totalorder %s141, %s142
      %p154 = scmp.eq.s32.totalorder %s27, 1
      %p155 = por %p153, %p154
      %p157 = scmp.ne.s32.totalorder %s142, %s156
      %p158 = scmp.eq.s32.totalorder %s27, 0
      %p159 = por %p157, %p158
      %s161 = sadd.s32 %s160, 1
      %p164 = scmp.eq.s32.totalorder %s21, 1
      %p165 = scmp.ne.s32.totalorder %s160, %s162
      %p166 = scmp.eq.s32.totalorder %s21, 0
      %p167 = por %p165, %p166
      %p168 = scmp.ne.s32.totalorder %s160, %s162
      %p169 = scmp.eq.s32.totalorder %s26, 1
      %p170 = por %p168, %p169
      %p171 = scmp.ne.s32.totalorder %s162, %s163
      %p172 = scmp.eq.s32.totalorder %s26, 0
      %p173 = por %p171, %p172
      %p174 = scmp.ne.s32.totalorder %s162, %s163
      %p175 = scmp.eq.s32.totalorder %s27, 1
      %p176 = por %p174, %p175
      %p178 = scmp.ne.s32.totalorder %s163, %s177
      %p179 = scmp.eq.s32.totalorder %s27, 0
      %p180 = por %p178, %p179
      %s181 = ssub.s32 %s21, %s28
      %p182 = scmp.eq.s32.totalorder %s181, 0
      %s184 = sadd.s32 %s183, 1
      %s185 = scalar_select %p182, %s183, %s184
      %p188 = pneg %p182
      %p189 = scmp.eq.s32.totalorder %s21, 1
      %p190 = por %p188, %p189
      %p191 = scmp.ne.s32.totalorder %s183, %s186
      %p192 = scmp.eq.s32.totalorder %s21, 0
      %p193 = por %p191, %p192
      %p194 = scmp.ne.s32.totalorder %s183, %s186
      %p195 = scmp.eq.s32.totalorder %s26, 1
      %p196 = por %p194, %p195
      %p197 = scmp.ne.s32.totalorder %s186, %s187
      %p198 = scmp.eq.s32.totalorder %s26, 0
      %p199 = por %p197, %p198
      %p200 = scmp.ne.s32.totalorder %s186, %s187
      %p201 = scmp.eq.s32.totalorder %s27, 1
      %p202 = por %p200, %p201
      %p204 = scmp.ne.s32.totalorder %s187, %s203
      %p205 = scmp.eq.s32.totalorder %s27, 0
      %p206 = por %p204, %p205
      %p207 = scmp.le.s32.totalorder 1, %s21
      %p208 = scmp.lt.s32.totalorder %s21, 3
      %p209 = pnand %p207, %p208
      %p210 = pneg %p209
      // Predicated region
      $region9: #{tpu_custom_call.1} parent=5 // pred_check
        _
      $region10: #{tpu_custom_call.1} parent=5 // pred_check_branch
        %212 = sbr.rel (%p209) target = $region12
      $region11: #{tpu_custom_call.1} parent=5 // pred_region
        %s213 = ssub.s32 %s21, 1
        // Predicated region
        $region13: #{tpu_custom_call.1} parent=11 // pred_check
          %p214 = pneg %p68
        $region14: #{tpu_custom_call.1} parent=11 // pred_check_branch
          %216 = sbr.rel (%p214) target = $region16
        $region15: #{tpu_custom_call.1} parent=11 // pred_region
          %s218 = ssub.s32 4096, 4096
          %219 = vsyncadd [#allocation6], %s218
          %s220 = sshll.u32 [#allocation5], 4
          %s221 = int_to_ptr.vmem [resolvable:$true] %s220
          %226 = dma.hbm_to_vmem [thread:$0]  %s1, 4096, %s221, [#allocation6], 128, 128, 8
        $region16: #{tpu_custom_call.1} parent=11 // pred_fallthru
          _
        // Predicated region
        $region17: #{tpu_custom_call.1} parent=11 // pred_check
          %p227 = pneg %p89
        $region18: #{tpu_custom_call.1} parent=11 // pred_check_branch
          %229 = sbr.rel (%p227) target = $region20
        $region19: #{tpu_custom_call.1} parent=11 // pred_region
          _
        $region20: #{tpu_custom_call.1} parent=11 // pred_fallthru
          _
        // Predicated region
        $region21: #{tpu_custom_call.1} parent=11 // pred_check
          %p230 = pneg %p110
        $region22: #{tpu_custom_call.1} parent=11 // pred_check_branch
          %232 = sbr.rel (%p230) target = $region24
        $region23: #{tpu_custom_call.1} parent=11 // pred_region
          %s234 = ssub.s32 4096, 4096
          %235 = vsyncadd [#allocation6], %s234
          %s236 = sshll.u32 [#allocation7], 4
          %s237 = int_to_ptr.vmem [resolvable:$true] %s236
          %242 = dma.hbm_to_vmem [thread:$0]  %s3, 4096, %s237, [#allocation6], 128, 128, 8
        $region24: #{tpu_custom_call.1} parent=11 // pred_fallthru
          _
        // Predicated region
        $region25: #{tpu_custom_call.1} parent=11 // pred_check
          %p243 = pneg %p131
        $region26: #{tpu_custom_call.1} parent=11 // pred_check_branch
          %245 = sbr.rel (%p243) target = $region28
        $region27: #{tpu_custom_call.1} parent=11 // pred_region
          _
        $region28: #{tpu_custom_call.1} parent=11 // pred_fallthru
          _
        // Predicated region
        $region29: #{tpu_custom_call.1} parent=11 // pred_check
          %p246 = pneg %p152
        $region30: #{tpu_custom_call.1} parent=11 // pred_check_branch
          %248 = sbr.rel (%p246) target = $region32
        $region31: #{tpu_custom_call.1} parent=11 // pred_region
          %s250 = ssub.s32 12288, 12288
          %251 = vsyncadd [#allocation9], %s250
          %s252 = sshll.u32 [#allocation8], 4
          %s253 = int_to_ptr.vmem [resolvable:$true] %s252
          %258 = dma.hbm_to_vmem [thread:$0]  %s5, 12288, %s253, [#allocation9], 384, 384, 24
        $region32: #{tpu_custom_call.1} parent=11 // pred_fallthru
          _
        // Predicated region
        $region33: #{tpu_custom_call.1} parent=11 // pred_check
          %p259 = pneg %p173
        $region34: #{tpu_custom_call.1} parent=11 // pred_check_branch
          %261 = sbr.rel (%p259) target = $region36
        $region35: #{tpu_custom_call.1} parent=11 // pred_region
          _
        $region36: #{tpu_custom_call.1} parent=11 // pred_fallthru
          _
      $region12: #{tpu_custom_call.1} parent=5 // pred_fallthru
        _
      %p262 = scmp.lt.s32.totalorder %s21, 2
      // Predicated region
      $region37: #{tpu_custom_call.1} parent=5 // pred_check
        %p263 = pneg %p262
      $region38: #{tpu_custom_call.1} parent=5 // pred_check_branch
        %265 = sbr.rel (%p263) target = $region40
      $region39: #{tpu_custom_call.1} parent=5 // pred_region
        // Predicated region
        $region41: #{tpu_custom_call.1} parent=39 // pred_check
          %p266 = pneg %p41
        $region42: #{tpu_custom_call.1} parent=39 // pred_check_branch
          %268 = sbr.rel (%p266) target = $region44
        $region43: #{tpu_custom_call.1} parent=39 // pred_region
          %s269 = sand.u32 %s31, 1
          %s270 = scalar_lea.sflag [#allocation3], %s269
          %s271 = sand.u32 %s31, 1
          %s272 = smul.addr %s271, 32
          %s273 = scalar_lea.vmem [#allocation2], %s272
          %s274 = smul.u32 4, %s21
          %s276 = ssub.s32 512, 512
          %277 = vsyncadd %s270, %s276
          %s278 = smul.addr %s274, 2
          %s279 = smul.addr %s278, 64
          %s280 = scalar_lea.hbm %s0, %s279
          %s281 = sshll.u32 %s273, 4
          %s282 = int_to_ptr.vmem [resolvable:$true] %s281
          %287 = dma.hbm_to_vmem [thread:$0]  %s280, 512, %s282, %s270, 128, 128, 8
        $region44: #{tpu_custom_call.1} parent=39 // pred_fallthru
          _
      $region40: #{tpu_custom_call.1} parent=5 // pred_fallthru
        _
      %p288 = scmp.le.s32.totalorder 1, %s21
      %p289 = scmp.lt.s32.totalorder %s21, 3
      %p290 = pnand %p288, %p289
      %p291 = pneg %p290
      // Predicated region
      $region45: #{tpu_custom_call.1} parent=5 // pred_check
        _
      $region46: #{tpu_custom_call.1} parent=5 // pred_check_branch
        %293 = sbr.rel (%p290) target = $region48
      $region47: #{tpu_custom_call.1} parent=5 // pred_region
        %s294 = ssub.s32 %s21, 1
        %s295 = sand.u32 %s34, 1
        %s296 = scalar_lea.sflag [#allocation3], %s295
        %s297 = sand.u32 %s34, 1
        %s298 = smul.addr %s297, 32
        %s299 = scalar_lea.vmem [#allocation2], %s298
        // Predicated region
        $region49: #{tpu_custom_call.1} parent=47 // pred_check
          %p300 = pneg %p47
        $region50: #{tpu_custom_call.1} parent=47 // pred_check_branch
          %302 = sbr.rel (%p300) target = $region52
        $region51: #{tpu_custom_call.1} parent=47 // pred_region
          %303 = dma.done %s296, 512
        $region52: #{tpu_custom_call.1} parent=47 // pred_fallthru
          _
        // Predicated region
        $region53: #{tpu_custom_call.1} parent=47 // pred_check
          %p304 = pneg %p68
        $region54: #{tpu_custom_call.1} parent=47 // pred_check_branch
          %306 = sbr.rel (%p304) target = $region56
        $region55: #{tpu_custom_call.1} parent=47 // pred_region
          %307 = dma.done [#allocation6], 4096
        $region56: #{tpu_custom_call.1} parent=47 // pred_fallthru
          _
        // Predicated region
        $region57: #{tpu_custom_call.1} parent=47 // pred_check
          %p308 = pneg %p110
        $region58: #{tpu_custom_call.1} parent=47 // pred_check_branch
          %310 = sbr.rel (%p308) target = $region60
        $region59: #{tpu_custom_call.1} parent=47 // pred_region
          %311 = dma.done [#allocation6], 4096
        $region60: #{tpu_custom_call.1} parent=47 // pred_fallthru
          _
        // Predicated region
        $region61: #{tpu_custom_call.1} parent=47 // pred_check
          %p312 = pneg %p152
        $region62: #{tpu_custom_call.1} parent=47 // pred_check_branch
          %314 = sbr.rel (%p312) target = $region64
        $region63: #{tpu_custom_call.1} parent=47 // pred_region
          %315 = dma.done [#allocation9], 12288
        $region64: #{tpu_custom_call.1} parent=47 // pred_fallthru
          _
        %s316 = sand.u32 %s34, 1
        %s317 = scalar_lea.sflag [#allocation3], %s316
        %s318 = sand.u32 %s34, 1
        %s319 = smul.addr %s318, 32
        %s320 = scalar_lea.vmem [#allocation2], %s319
        %p321 = pneg %p47
        %p322 = pneg %p44
        %p323 = pneg %p68
        %p324 = pneg %p65
        %p325 = pneg %p89
        %p326 = pneg %p86
        %p327 = pneg %p110
        %p328 = pneg %p107
        %p329 = pneg %p131
        %p330 = pneg %p128
        %p331 = pneg %p152
        %p332 = pneg %p149
        %p333 = pneg %p173
        %p334 = pneg %p170
        %p335 = pneg %p199
        %p336 = pneg %p196
        %s337 = sand.u32 %s186, 1
        %s338 = scalar_lea.sflag [#allocation4], %s337
        %s339 = sand.u32 %s186, 1
        %s340 = smul.addr %s339, 192
        %s341 = scalar_lea.vmem [#allocation10], %s340
        %s342 = smul.u32 4, %s26
        %s343 = smul.u32 4, %s26
        %v344 = vld [vmem:[%s299] sm:$0xff]
        %v345 = vld [vmem:[%s299 + $0x8] sm:$0xff]
        %v346 = vld [vmem:[%s299 + $0x10] sm:$0xff]
        %v347 = vld [vmem:[%s299 + $0x18] sm:$0xff]
        %v348 = vld [vmem:[#allocation5] sm:$0xff]
        %v349 = vld [vmem:[#allocation5 + $0x8] sm:$0xff]
        %v350 = vld [vmem:[#allocation5 + $0x10] sm:$0xff]
        %v351 = vld [vmem:[#allocation5 + $0x18] sm:$0xff]
        %v352 = vld [vmem:[#allocation5 + $0x20] sm:$0xff]
        %v353 = vld [vmem:[#allocation5 + $0x28] sm:$0xff]
        %v354 = vld [vmem:[#allocation5 + $0x30] sm:$0xff]
        %v355 = vld [vmem:[#allocation5 + $0x38] sm:$0xff]
        %v356 = vld [vmem:[#allocation5 + $0x40] sm:$0xff]
        %v357 = vld [vmem:[#allocation5 + $0x48] sm:$0xff]
        %v358 = vld [vmem:[#allocation5 + $0x50] sm:$0xff]
        %v359 = vld [vmem:[#allocation5 + $0x58] sm:$0xff]
        %v360 = vld [vmem:[#allocation5 + $0x60] sm:$0xff]
        %v361 = vld [vmem:[#allocation5 + $0x68] sm:$0xff]
        %v362 = vld [vmem:[#allocation5 + $0x70] sm:$0xff]
        %v363 = vld [vmem:[#allocation5 + $0x78] sm:$0xff]
        %v364 = vld [vmem:[#allocation5 + $0x80] sm:$0xff]
        %v365 = vld [vmem:[#allocation5 + $0x88] sm:$0xff]
        %v366 = vld [vmem:[#allocation5 + $0x90] sm:$0xff]
        %v367 = vld [vmem:[#allocation5 + $0x98] sm:$0xff]
        %v368 = vld [vmem:[#allocation5 + $0xa0] sm:$0xff]
        %v369 = vld [vmem:[#allocation5 + $0xa8] sm:$0xff]
        %v370 = vld [vmem:[#allocation5 + $0xb0] sm:$0xff]
        %v371 = vld [vmem:[#allocation5 + $0xb8] sm:$0xff]
        %v372 = vld [vmem:[#allocation5 + $0xc0] sm:$0xff]
        %v373 = vld [vmem:[#allocation5 + $0xc8] sm:$0xff]
        %v374 = vld [vmem:[#allocation5 + $0xd0] sm:$0xff]
        %v375 = vld [vmem:[#allocation5 + $0xd8] sm:$0xff]
        %v376 = vld [vmem:[#allocation5 + $0xe0] sm:$0xff]
        %v377 = vld [vmem:[#allocation5 + $0xe8] sm:$0xff]
        %v378 = vld [vmem:[#allocation5 + $0xf0] sm:$0xff]
        %v379 = vld [vmem:[#allocation5 + $0xf8] sm:$0xff]
        %v380 = vld [vmem:[%s2] sm:$0x3]
        %v382 = vlaneseq
        %v383 = vshrl.u32 %v382, 7
        %v384 = vsub.s32 0, %v383
        %v385 = vrot.slane %v380, %v384
        %v386 = vlaneseq
        %v387 = vshrl.u32 %v386, 7
        %v388 = vsub.s32 1, %v387
        %v389 = vrot.slane %v380, %v388
        %v396 = vunpack.c.l.b16 %v344
        %v397 = vunpack.c.h.b16 %v344
        %v398 = vunpack.c.l.b16 %v345
        %v399 = vunpack.c.h.b16 %v345
        %v400 = vunpack.c.l.b16 %v346
        %v401 = vunpack.c.h.b16 %v346
        %v402 = vunpack.c.l.b16 %v347
        %v403 = vunpack.c.h.b16 %v347
        %v404 = vpack.c.b16 %v398, %v396
        %v405 = vpack.c.b16 %v399, %v397
        %v406 = vpack.c.b16 %v402, %v400
        %v407 = vpack.c.b16 %v403, %v401
        %v444 = vunpack.c.l.b16 %v348
        %v445 = vunpack.c.h.b16 %v348
        %v446 = vunpack.c.l.b16 %v349
        %v447 = vunpack.c.h.b16 %v349
        %v448 = vunpack.c.l.b16 %v350
        %v449 = vunpack.c.h.b16 %v350
        %v450 = vunpack.c.l.b16 %v351
        %v451 = vunpack.c.h.b16 %v351
        %v452 = vunpack.c.l.b16 %v352
        %v453 = vunpack.c.h.b16 %v352
        %v454 = vunpack.c.l.b16 %v353
        %v455 = vunpack.c.h.b16 %v353
        %v456 = vunpack.c.l.b16 %v354
        %v457 = vunpack.c.h.b16 %v354
        %v458 = vunpack.c.l.b16 %v355
        %v459 = vunpack.c.h.b16 %v355
        %v460 = vunpack.c.l.b16 %v356
        %v461 = vunpack.c.h.b16 %v356
        %v462 = vunpack.c.l.b16 %v357
        %v463 = vunpack.c.h.b16 %v357
        %v464 = vunpack.c.l.b16 %v358
        %v465 = vunpack.c.h.b16 %v358
        %v466 = vunpack.c.l.b16 %v359
        %v467 = vunpack.c.h.b16 %v359
        %v468 = vunpack.c.l.b16 %v360
        %v469 = vunpack.c.h.b16 %v360
        %v470 = vunpack.c.l.b16 %v361
        %v471 = vunpack.c.h.b16 %v361
        %v472 = vunpack.c.l.b16 %v362
        %v473 = vunpack.c.h.b16 %v362
        %v474 = vunpack.c.l.b16 %v363
        %v475 = vunpack.c.h.b16 %v363
        %v476 = vunpack.c.l.b16 %v364
        %v477 = vunpack.c.h.b16 %v364
        %v478 = vunpack.c.l.b16 %v365
        %v479 = vunpack.c.h.b16 %v365
        %v480 = vunpack.c.l.b16 %v366
        %v481 = vunpack.c.h.b16 %v366
        %v482 = vunpack.c.l.b16 %v367
        %v483 = vunpack.c.h.b16 %v367
        %v484 = vunpack.c.l.b16 %v368
        %v485 = vunpack.c.h.b16 %v368
        %v486 = vunpack.c.l.b16 %v369
        %v487 = vunpack.c.h.b16 %v369
        %v488 = vunpack.c.l.b16 %v370
        %v489 = vunpack.c.h.b16 %v370
        %v490 = vunpack.c.l.b16 %v371
        %v491 = vunpack.c.h.b16 %v371
        %v492 = vunpack.c.l.b16 %v372
        %v493 = vunpack.c.h.b16 %v372
        %v494 = vunpack.c.l.b16 %v373
        %v495 = vunpack.c.h.b16 %v373
        %v496 = vunpack.c.l.b16 %v374
        %v497 = vunpack.c.h.b16 %v374
        %v498 = vunpack.c.l.b16 %v375
        %v499 = vunpack.c.h.b16 %v375
        %v500 = vunpack.c.l.b16 %v376
        %v501 = vunpack.c.h.b16 %v376
        %v502 = vunpack.c.l.b16 %v377
        %v503 = vunpack.c.h.b16 %v377
        %v504 = vunpack.c.l.b16 %v378
        %v505 = vunpack.c.h.b16 %v378
        %v506 = vunpack.c.l.b16 %v379
        %v507 = vunpack.c.h.b16 %v379
        %v508 = vpack.c.b16 %v446, %v444
        %v509 = vpack.c.b16 %v447, %v445
        %v510 = vpack.c.b16 %v450, %v448
        %v511 = vpack.c.b16 %v451, %v449
        %v512 = vpack.c.b16 %v454, %v452
        %v513 = vpack.c.b16 %v455, %v453
        %v514 = vpack.c.b16 %v458, %v456
        %v515 = vpack.c.b16 %v459, %v457
        %v516 = vpack.c.b16 %v462, %v460
        %v517 = vpack.c.b16 %v463, %v461
        %v518 = vpack.c.b16 %v466, %v464
        %v519 = vpack.c.b16 %v467, %v465
        %v520 = vpack.c.b16 %v470, %v468
        %v521 = vpack.c.b16 %v471, %v469
        %v522 = vpack.c.b16 %v474, %v472
        %v523 = vpack.c.b16 %v475, %v473
        %v524 = vpack.c.b16 %v478, %v476
        %v525 = vpack.c.b16 %v479, %v477
        %v526 = vpack.c.b16 %v482, %v480
        %v527 = vpack.c.b16 %v483, %v481
        %v528 = vpack.c.b16 %v486, %v484
        %v529 = vpack.c.b16 %v487, %v485
        %v530 = vpack.c.b16 %v490, %v488
        %v531 = vpack.c.b16 %v491, %v489
        %v532 = vpack.c.b16 %v494, %v492
        %v533 = vpack.c.b16 %v495, %v493
        %v534 = vpack.c.b16 %v498, %v496
        %v535 = vpack.c.b16 %v499, %v497
        %v536 = vpack.c.b16 %v502, %v500
        %v537 = vpack.c.b16 %v503, %v501
        %v538 = vpack.c.b16 %v506, %v504
        %v539 = vpack.c.b16 %v507, %v505
        %572 = vmatprep.subr.bf16.mxu0 %v509
        %573 = vmatpush1.bf16.msra.mxu0 %v508
        %574 = vmatprep.subr.bf16.mxu0 %v511
        %575 = vmatpush1.bf16.msra.mxu0 %v510
        %576 = vmatprep.subr.bf16.mxu0 %v513
        %577 = vmatpush1.bf16.msra.mxu0 %v512
        %578 = vmatprep.subr.bf16.mxu0 %v515
        %579 = vmatpush1.bf16.msra.mxu0 %v514
        %580 = vmatprep.subr.bf16.mxu0 %v517
        %581 = vmatpush1.bf16.msra.mxu0 %v516
        %582 = vmatprep.subr.bf16.mxu0 %v519
        %583 = vmatpush1.bf16.msra.mxu0 %v518
        %584 = vmatprep.subr.bf16.mxu0 %v521
        %585 = vmatpush1.bf16.msra.mxu0 %v520
        %586 = vmatprep.subr.bf16.mxu0 %v523
        %587 = vmatpush1.bf16.msra.mxu0 %v522
        %588 = vmatprep.subr.bf16.mxu0 %v525
        %589 = vmatpush1.bf16.msra.mxu0 %v524
        %590 = vmatprep.subr.bf16.mxu0 %v527
        %591 = vmatpush1.bf16.msra.mxu0 %v526
        %592 = vmatprep.subr.bf16.mxu0 %v529
        %593 = vmatpush1.bf16.msra.mxu0 %v528
        %594 = vmatprep.subr.bf16.mxu0 %v531
        %595 = vmatpush1.bf16.msra.mxu0 %v530
        %596 = vmatprep.subr.bf16.mxu0 %v533
        %597 = vmatpush1.bf16.msra.mxu0 %v532
        %598 = vmatprep.subr.bf16.mxu0 %v535
        %599 = vmatpush1.bf16.msra.mxu0 %v534
        %600 = vmatprep.subr.bf16.mxu0 %v537
        %601 = vmatpush1.bf16.msra.mxu0 %v536
        %602 = vmatprep.subr.bf16.mxu0 %v539
        %603 = vmatpush1.bf16.msra.mxu0 %v538
        %604 = vmatprep.mubr.bf16.mxu0 %v405
        %605 = vmatmul.mubr.bf16.gmra.mrb[0].mxu0 %v404
        %v606 = vpop.f32.mrb[0].mxu0
        %v607 = vadd.f32 %v385, %v606
        %v608 = vpop.f32.mrb[0].mxu0
        %v609 = vadd.f32 %v389, %v608
        %v610 = vpop.f32.mrb[0].mxu0
        %v611 = vadd.f32 %v385, %v610
        %v612 = vpop.f32.mrb[0].mxu0
        %v613 = vadd.f32 %v389, %v612
        %614 = vmatprep.mubr.bf16.mxu0 %v407
        %615 = vmatmul.mubr.bf16.gmra.mrb[0].mxu0 %v406
        %v616 = vpop.f32.mrb[0].mxu0
        %v617 = vadd.f32 %v385, %v616
        %v618 = vpop.f32.mrb[0].mxu0
        %v619 = vadd.f32 %v389, %v618
        %v620 = vpop.f32.mrb[0].mxu0
        %v621 = vadd.f32 %v385, %v620
        %v622 = vpop.f32.mrb[0].mxu0
        %v623 = vadd.f32 %v389, %v622
        %624 = vdwg.mxu0
        %v625 = vmax.f32 %v607, 0.0
        %v626 = vmax.f32 %v609, 0.0
        %v627 = vmax.f32 %v611, 0.0
        %v628 = vmax.f32 %v613, 0.0
        %v629 = vmax.f32 %v617, 0.0
        %v630 = vmax.f32 %v619, 0.0
        %v631 = vmax.f32 %v621, 0.0
        %v632 = vmax.f32 %v623, 0.0
        %v633 = vpack.c.bf16 %v627, %v625
        %v634 = vpack.c.bf16 %v628, %v626
        %v635 = vpack.c.bf16 %v631, %v629
        %v636 = vpack.c.bf16 %v632, %v630
        %v637 = vld [vmem:[#allocation7] sm:$0xff]
        %v638 = vld [vmem:[#allocation7 + $0x8] sm:$0xff]
        %v639 = vld [vmem:[#allocation7 + $0x10] sm:$0xff]
        %v640 = vld [vmem:[#allocation7 + $0x18] sm:$0xff]
        %v641 = vld [vmem:[#allocation7 + $0x20] sm:$0xff]
        %v642 = vld [vmem:[#allocation7 + $0x28] sm:$0xff]
        %v643 = vld [vmem:[#allocation7 + $0x30] sm:$0xff]
        %v644 = vld [vmem:[#allocation7 + $0x38] sm:$0xff]
        %v645 = vld [vmem:[#allocation7 + $0x40] sm:$0xff]
        %v646 = vld [vmem:[#allocation7 + $0x48] sm:$0xff]
        %v647 = vld [vmem:[#allocation7 + $0x50] sm:$0xff]
        %v648 = vld [vmem:[#allocation7 + $0x58] sm:$0xff]
        %v649 = vld [vmem:[#allocation7 + $0x60] sm:$0xff]
        %v650 = vld [vmem:[#allocation7 + $0x68] sm:$0xff]
        %v651 = vld [vmem:[#allocation7 + $0x70] sm:$0xff]
        %v652 = vld [vmem:[#allocation7 + $0x78] sm:$0xff]
        %v653 = vld [vmem:[#allocation7 + $0x80] sm:$0xff]
        %v654 = vld [vmem:[#allocation7 + $0x88] sm:$0xff]
        %v655 = vld [vmem:[#allocation7 + $0x90] sm:$0xff]
        %v656 = vld [vmem:[#allocation7 + $0x98] sm:$0xff]
        %v657 = vld [vmem:[#allocation7 + $0xa0] sm:$0xff]
        %v658 = vld [vmem:[#allocation7 + $0xa8] sm:$0xff]
        %v659 = vld [vmem:[#allocation7 + $0xb0] sm:$0xff]
        %v660 = vld [vmem:[#allocation7 + $0xb8] sm:$0xff]
        %v661 = vld [vmem:[#allocation7 + $0xc0] sm:$0xff]
        %v662 = vld [vmem:[#allocation7 + $0xc8] sm:$0xff]
        %v663 = vld [vmem:[#allocation7 + $0xd0] sm:$0xff]
        %v664 = vld [vmem:[#allocation7 + $0xd8] sm:$0xff]
        %v665 = vld [vmem:[#allocation7 + $0xe0] sm:$0xff]
        %v666 = vld [vmem:[#allocation7 + $0xe8] sm:$0xff]
        %v667 = vld [vmem:[#allocation7 + $0xf0] sm:$0xff]
        %v668 = vld [vmem:[#allocation7 + $0xf8] sm:$0xff]
        %v669 = vld [vmem:[%s4] sm:$0x3]
        %v671 = vlaneseq
        %v672 = vshrl.u32 %v671, 7
        %v673 = vsub.s32 0, %v672
        %v674 = vrot.slane %v669, %v673
        %v675 = vlaneseq
        %v676 = vshrl.u32 %v675, 7
        %v677 = vsub.s32 1, %v676
        %v678 = vrot.slane %v669, %v677
        %v713 = vunpack.c.l.b16 %v637
        %v714 = vunpack.c.h.b16 %v637
        %v715 = vunpack.c.l.b16 %v638
        %v716 = vunpack.c.h.b16 %v638
        %v717 = vunpack.c.l.b16 %v639
        %v718 = vunpack.c.h.b16 %v639
        %v719 = vunpack.c.l.b16 %v640
        %v720 = vunpack.c.h.b16 %v640
        %v721 = vunpack.c.l.b16 %v641
        %v722 = vunpack.c.h.b16 %v641
        %v723 = vunpack.c.l.b16 %v642
        %v724 = vunpack.c.h.b16 %v642
        %v725 = vunpack.c.l.b16 %v643
        %v726 = vunpack.c.h.b16 %v643
        %v727 = vunpack.c.l.b16 %v644
        %v728 = vunpack.c.h.b16 %v644
        %v729 = vunpack.c.l.b16 %v645
        %v730 = vunpack.c.h.b16 %v645
        %v731 = vunpack.c.l.b16 %v646
        %v732 = vunpack.c.h.b16 %v646
        %v733 = vunpack.c.l.b16 %v647
        %v734 = vunpack.c.h.b16 %v647
        %v735 = vunpack.c.l.b16 %v648
        %v736 = vunpack.c.h.b16 %v648
        %v737 = vunpack.c.l.b16 %v649
        %v738 = vunpack.c.h.b16 %v649
        %v739 = vunpack.c.l.b16 %v650
        %v740 = vunpack.c.h.b16 %v650
        %v741 = vunpack.c.l.b16 %v651
        %v742 = vunpack.c.h.b16 %v651
        %v743 = vunpack.c.l.b16 %v652
        %v744 = vunpack.c.h.b16 %v652
        %v745 = vunpack.c.l.b16 %v653
        %v746 = vunpack.c.h.b16 %v653
        %v747 = vunpack.c.l.b16 %v654
        %v748 = vunpack.c.h.b16 %v654
        %v749 = vunpack.c.l.b16 %v655
        %v750 = vunpack.c.h.b16 %v655
        %v751 = vunpack.c.l.b16 %v656
        %v752 = vunpack.c.h.b16 %v656
        %v753 = vunpack.c.l.b16 %v657
        %v754 = vunpack.c.h.b16 %v657
        %v755 = vunpack.c.l.b16 %v658
        %v756 = vunpack.c.h.b16 %v658
        %v757 = vunpack.c.l.b16 %v659
        %v758 = vunpack.c.h.b16 %v659
        %v759 = vunpack.c.l.b16 %v660
        %v760 = vunpack.c.h.b16 %v660
        %v761 = vunpack.c.l.b16 %v661
        %v762 = vunpack.c.h.b16 %v661
        %v763 = vunpack.c.l.b16 %v662
        %v764 = vunpack.c.h.b16 %v662
        %v765 = vunpack.c.l.b16 %v663
        %v766 = vunpack.c.h.b16 %v663
        %v767 = vunpack.c.l.b16 %v664
        %v768 = vunpack.c.h.b16 %v664
        %v769 = vunpack.c.l.b16 %v665
        %v770 = vunpack.c.h.b16 %v665
        %v771 = vunpack.c.l.b16 %v666
        %v772 = vunpack.c.h.b16 %v666
        %v773 = vunpack.c.l.b16 %v667
        %v774 = vunpack.c.h.b16 %v667
        %v775 = vunpack.c.l.b16 %v668
        %v776 = vunpack.c.h.b16 %v668
        %v777 = vpack.c.b16 %v715, %v713
        %v778 = vpack.c.b16 %v716, %v714
        %v779 = vpack.c.b16 %v719, %v717
        %v780 = vpack.c.b16 %v720, %v718
        %v781 = vpack.c.b16 %v723, %v721
        %v782 = vpack.c.b16 %v724, %v722
        %v783 = vpack.c.b16 %v727, %v725
        %v784 = vpack.c.b16 %v728, %v726
        %v785 = vpack.c.b16 %v731, %v729
        %v786 = vpack.c.b16 %v732, %v730
        %v787 = vpack.c.b16 %v735, %v733
        %v788 = vpack.c.b16 %v736, %v734
        %v789 = vpack.c.b16 %v739, %v737
        %v790 = vpack.c.b16 %v740, %v738
        %v791 = vpack.c.b16 %v743, %v741
        %v792 = vpack.c.b16 %v744, %v742
        %v793 = vpack.c.b16 %v747, %v745
        %v794 = vpack.c.b16 %v748, %v746
        %v795 = vpack.c.b16 %v751, %v749
        %v796 = vpack.c.b16 %v752, %v750
        %v797 = vpack.c.b16 %v755, %v753
        %v798 = vpack.c.b16 %v756, %v754
        %v799 = vpack.c.b16 %v759, %v757
        %v800 = vpack.c.b16 %v760, %v758
        %v801 = vpack.c.b16 %v763, %v761
        %v802 = vpack.c.b16 %v764, %v762
        %v803 = vpack.c.b16 %v767, %v765
        %v804 = vpack.c.b16 %v768, %v766
        %v805 = vpack.c.b16 %v771, %v769
        %v806 = vpack.c.b16 %v772, %v770
        %v807 = vpack.c.b16 %v775, %v773
        %v808 = vpack.c.b16 %v776, %v774
        %841 = vmatprep.subr.bf16.mxu0 %v778
        %842 = vmatpush1.bf16.msra.mxu0 %v777
        %843 = vmatprep.subr.bf16.mxu0 %v780
        %844 = vmatpush1.bf16.msra.mxu0 %v779
        %845 = vmatprep.subr.bf16.mxu0 %v782
        %846 = vmatpush1.bf16.msra.mxu0 %v781
        %847 = vmatprep.subr.bf16.mxu0 %v784
        %848 = vmatpush1.bf16.msra.mxu0 %v783
        %849 = vmatprep.subr.bf16.mxu0 %v786
        %850 = vmatpush1.bf16.msra.mxu0 %v785
        %851 = vmatprep.subr.bf16.mxu0 %v788
        %852 = vmatpush1.bf16.msra.mxu0 %v787
        %853 = vmatprep.subr.bf16.mxu0 %v790
        %854 = vmatpush1.bf16.msra.mxu0 %v789
        %855 = vmatprep.subr.bf16.mxu0 %v792
        %856 = vmatpush1.bf16.msra.mxu0 %v791
        %857 = vmatprep.subr.bf16.mxu0 %v794
        %858 = vmatpush1.bf16.msra.mxu0 %v793
        %859 = vmatprep.subr.bf16.mxu0 %v796
        %860 = vmatpush1.bf16.msra.mxu0 %v795
        %861 = vmatprep.subr.bf16.mxu0 %v798
        %862 = vmatpush1.bf16.msra.mxu0 %v797
        %863 = vmatprep.subr.bf16.mxu0 %v800
        %864 = vmatpush1.bf16.msra.mxu0 %v799
        %865 = vmatprep.subr.bf16.mxu0 %v802
        %866 = vmatpush1.bf16.msra.mxu0 %v801
        %867 = vmatprep.subr.bf16.mxu0 %v804
        %868 = vmatpush1.bf16.msra.mxu0 %v803
        %869 = vmatprep.subr.bf16.mxu0 %v806
        %870 = vmatpush1.bf16.msra.mxu0 %v805
        %871 = vmatprep.subr.bf16.mxu0 %v808
        %872 = vmatpush1.bf16.msra.mxu0 %v807
        %873 = vmatprep.mubr.bf16.mxu0 %v634
        %874 = vmatmul.mubr.bf16.gmra.mrb[0].mxu0 %v633
        %v875 = vpop.f32.mrb[0].mxu0
        %v876 = vadd.f32 %v674, %v875
        %v877 = vpop.f32.mrb[0].mxu0
        %v878 = vadd.f32 %v678, %v877
        %v879 = vpop.f32.mrb[0].mxu0
        %v880 = vadd.f32 %v674, %v879
        %v881 = vpop.f32.mrb[0].mxu0
        %v882 = vadd.f32 %v678, %v881
        %883 = vmatprep.mubr.bf16.mxu0 %v636
        %884 = vmatmul.mubr.bf16.gmra.mrb[0].mxu0 %v635
        %v885 = vpop.f32.mrb[0].mxu0
        %v886 = vadd.f32 %v674, %v885
        %v887 = vpop.f32.mrb[0].mxu0
        %v888 = vadd.f32 %v678, %v887
        %v889 = vpop.f32.mrb[0].mxu0
        %v890 = vadd.f32 %v674, %v889
        %v891 = vpop.f32.mrb[0].mxu0
        %v892 = vadd.f32 %v678, %v891
        %893 = vdwg.mxu0
        %v894 = vmax.f32 %v876, 0.0
        %v895 = vmax.f32 %v878, 0.0
        %v896 = vmax.f32 %v880, 0.0
        %v897 = vmax.f32 %v882, 0.0
        %v898 = vmax.f32 %v886, 0.0
        %v899 = vmax.f32 %v888, 0.0
        %v900 = vmax.f32 %v890, 0.0
        %v901 = vmax.f32 %v892, 0.0
        %v902 = vpack.c.bf16 %v896, %v894
        %v903 = vpack.c.bf16 %v897, %v895
        %v904 = vpack.c.bf16 %v900, %v898
        %v905 = vpack.c.bf16 %v901, %v899
        %v906 = vld [vmem:[#allocation8] sm:$0xff]
        %v907 = vld [vmem:[#allocation8 + $0x8] sm:$0xff]
        %v908 = vld [vmem:[#allocation8 + $0x10] sm:$0xff]
        %v909 = vld [vmem:[#allocation8 + $0x18] sm:$0xff]
        %v910 = vld [vmem:[#allocation8 + $0x20] sm:$0xff]
        %v911 = vld [vmem:[#allocation8 + $0x28] sm:$0xff]
        %v912 = vld [vmem:[#allocation8 + $0x30] sm:$0xff]
        %v913 = vld [vmem:[#allocation8 + $0x38] sm:$0xff]
        %v914 = vld [vmem:[#allocation8 + $0x40] sm:$0xff]
        %v915 = vld [vmem:[#allocation8 + $0x48] sm:$0xff]
        %v916 = vld [vmem:[#allocation8 + $0x50] sm:$0xff]
        %v917 = vld [vmem:[#allocation8 + $0x58] sm:$0xff]
        %v918 = vld [vmem:[#allocation8 + $0x60] sm:$0xff]
        %v919 = vld [vmem:[#allocation8 + $0x68] sm:$0xff]
        %v920 = vld [vmem:[#allocation8 + $0x70] sm:$0xff]
        %v921 = vld [vmem:[#allocation8 + $0x78] sm:$0xff]
        %v922 = vld [vmem:[#allocation8 + $0x80] sm:$0xff]
        %v923 = vld [vmem:[#allocation8 + $0x88] sm:$0xff]
        %v924 = vld [vmem:[#allocation8 + $0x90] sm:$0xff]
        %v925 = vld [vmem:[#allocation8 + $0x98] sm:$0xff]
        %v926 = vld [vmem:[#allocation8 + $0xa0] sm:$0xff]
        %v927 = vld [vmem:[#allocation8 + $0xa8] sm:$0xff]
        %v928 = vld [vmem:[#allocation8 + $0xb0] sm:$0xff]
        %v929 = vld [vmem:[#allocation8 + $0xb8] sm:$0xff]
        %v930 = vld [vmem:[#allocation8 + $0xc0] sm:$0xff]
        %v931 = vld [vmem:[#allocation8 + $0xc8] sm:$0xff]
        %v932 = vld [vmem:[#allocation8 + $0xd0] sm:$0xff]
        %v933 = vld [vmem:[#allocation8 + $0xd8] sm:$0xff]
        %v934 = vld [vmem:[#allocation8 + $0xe0] sm:$0xff]
        %v935 = vld [vmem:[#allocation8 + $0xe8] sm:$0xff]
        %v936 = vld [vmem:[#allocation8 + $0xf0] sm:$0xff]
        %v937 = vld [vmem:[#allocation8 + $0xf8] sm:$0xff]
        %v938 = vld [vmem:[#allocation8 + $0x100] sm:$0xff]
        %v939 = vld [vmem:[#allocation8 + $0x108] sm:$0xff]
        %v940 = vld [vmem:[#allocation8 + $0x110] sm:$0xff]
        %v941 = vld [vmem:[#allocation8 + $0x118] sm:$0xff]
        %v942 = vld [vmem:[#allocation8 + $0x120] sm:$0xff]
        %v943 = vld [vmem:[#allocation8 + $0x128] sm:$0xff]
        %v944 = vld [vmem:[#allocation8 + $0x130] sm:$0xff]
        %v945 = vld [vmem:[#allocation8 + $0x138] sm:$0xff]
        %v946 = vld [vmem:[#allocation8 + $0x140] sm:$0xff]
        %v947 = vld [vmem:[#allocation8 + $0x148] sm:$0xff]
        %v948 = vld [vmem:[#allocation8 + $0x150] sm:$0xff]
        %v949 = vld [vmem:[#allocation8 + $0x158] sm:$0xff]
        %v950 = vld [vmem:[#allocation8 + $0x160] sm:$0xff]
        %v951 = vld [vmem:[#allocation8 + $0x168] sm:$0xff]
        %v952 = vld [vmem:[#allocation8 + $0x170] sm:$0xff]
        %v953 = vld [vmem:[#allocation8 + $0x178] sm:$0xff]
        %v954 = vld [vmem:[#allocation8 + $0x180] sm:$0xff]
        %v955 = vld [vmem:[#allocation8 + $0x188] sm:$0xff]
        %v956 = vld [vmem:[#allocation8 + $0x190] sm:$0xff]
        %v957 = vld [vmem:[#allocation8 + $0x198] sm:$0xff]
        %v958 = vld [vmem:[#allocation8 + $0x1a0] sm:$0xff]
        %v959 = vld [vmem:[#allocation8 + $0x1a8] sm:$0xff]
        %v960 = vld [vmem:[#allocation8 + $0x1b0] sm:$0xff]
        %v961 = vld [vmem:[#allocation8 + $0x1b8] sm:$0xff]
        %v962 = vld [vmem:[#allocation8 + $0x1c0] sm:$0xff]
        %v963 = vld [vmem:[#allocation8 + $0x1c8] sm:$0xff]
        %v964 = vld [vmem:[#allocation8 + $0x1d0] sm:$0xff]
        %v965 = vld [vmem:[#allocation8 + $0x1d8] sm:$0xff]
        %v966 = vld [vmem:[#allocation8 + $0x1e0] sm:$0xff]
        %v967 = vld [vmem:[#allocation8 + $0x1e8] sm:$0xff]
        %v968 = vld [vmem:[#allocation8 + $0x1f0] sm:$0xff]
        %v969 = vld [vmem:[#allocation8 + $0x1f8] sm:$0xff]
        %v970 = vld [vmem:[#allocation8 + $0x200] sm:$0xff]
        %v971 = vld [vmem:[#allocation8 + $0x208] sm:$0xff]
        %v972 = vld [vmem:[#allocation8 + $0x210] sm:$0xff]
        %v973 = vld [vmem:[#allocation8 + $0x218] sm:$0xff]
        %v974 = vld [vmem:[#allocation8 + $0x220] sm:$0xff]
        %v975 = vld [vmem:[#allocation8 + $0x228] sm:$0xff]
        %v976 = vld [vmem:[#allocation8 + $0x230] sm:$0xff]
        %v977 = vld [vmem:[#allocation8 + $0x238] sm:$0xff]
        %v978 = vld [vmem:[#allocation8 + $0x240] sm:$0xff]
        %v979 = vld [vmem:[#allocation8 + $0x248] sm:$0xff]
        %v980 = vld [vmem:[#allocation8 + $0x250] sm:$0xff]
        %v981 = vld [vmem:[#allocation8 + $0x258] sm:$0xff]
        %v982 = vld [vmem:[#allocation8 + $0x260] sm:$0xff]
        %v983 = vld [vmem:[#allocation8 + $0x268] sm:$0xff]
        %v984 = vld [vmem:[#allocation8 + $0x270] sm:$0xff]
        %v985 = vld [vmem:[#allocation8 + $0x278] sm:$0xff]
        %v986 = vld [vmem:[#allocation8 + $0x280] sm:$0xff]
        %v987 = vld [vmem:[#allocation8 + $0x288] sm:$0xff]
        %v988 = vld [vmem:[#allocation8 + $0x290] sm:$0xff]
        %v989 = vld [vmem:[#allocation8 + $0x298] sm:$0xff]
        %v990 = vld [vmem:[#allocation8 + $0x2a0] sm:$0xff]
        %v991 = vld [vmem:[#allocation8 + $0x2a8] sm:$0xff]
        %v992 = vld [vmem:[#allocation8 + $0x2b0] sm:$0xff]
        %v993 = vld [vmem:[#allocation8 + $0x2b8] sm:$0xff]
        %v994 = vld [vmem:[#allocation8 + $0x2c0] sm:$0xff]
        %v995 = vld [vmem:[#allocation8 + $0x2c8] sm:$0xff]
        %v996 = vld [vmem:[#allocation8 + $0x2d0] sm:$0xff]
        %v997 = vld [vmem:[#allocation8 + $0x2d8] sm:$0xff]
        %v998 = vld [vmem:[#allocation8 + $0x2e0] sm:$0xff]
        %v999 = vld [vmem:[#allocation8 + $0x2e8] sm:$0xff]
        %v1000 = vld [vmem:[#allocation8 + $0x2f0] sm:$0xff]
        %v1001 = vld [vmem:[#allocation8 + $0x2f8] sm:$0xff]
        %v1002 = vld [vmem:[%s6] sm:$0x3f]
        %v1004 = vlaneseq
        %v1005 = vshrl.u32 %v1004, 7
        %v1006 = vsub.s32 0, %v1005
        %v1007 = vrot.slane %v1002, %v1006
        %v1008 = vlaneseq
        %v1009 = vshrl.u32 %v1008, 7
        %v1010 = vsub.s32 1, %v1009
        %v1011 = vrot.slane %v1002, %v1010
        %v1012 = vlaneseq
        %v1013 = vshrl.u32 %v1012, 7
        %v1014 = vsub.s32 2, %v1013
        %v1015 = vrot.slane %v1002, %v1014
        %v1016 = vlaneseq
        %v1017 = vshrl.u32 %v1016, 7
        %v1018 = vsub.s32 3, %v1017
        %v1019 = vrot.slane %v1002, %v1018
        %v1020 = vlaneseq
        %v1021 = vshrl.u32 %v1020, 7
        %v1022 = vsub.s32 4, %v1021
        %v1023 = vrot.slane %v1002, %v1022
        %v1024 = vlaneseq
        %v1025 = vshrl.u32 %v1024, 7
        %v1026 = vsub.s32 5, %v1025
        %v1027 = vrot.slane %v1002, %v1026
        %v1130 = vunpack.c.l.b16 %v906
        %v1131 = vunpack.c.h.b16 %v906
        %v1132 = vunpack.c.l.b16 %v907
        %v1133 = vunpack.c.h.b16 %v907
        %v1134 = vunpack.c.l.b16 %v908
        %v1135 = vunpack.c.h.b16 %v908
        %v1136 = vunpack.c.l.b16 %v909
        %v1137 = vunpack.c.h.b16 %v909
        %v1138 = vunpack.c.l.b16 %v910
        %v1139 = vunpack.c.h.b16 %v910
        %v1140 = vunpack.c.l.b16 %v911
        %v1141 = vunpack.c.h.b16 %v911
        %v1142 = vunpack.c.l.b16 %v912
        %v1143 = vunpack.c.h.b16 %v912
        %v1144 = vunpack.c.l.b16 %v913
        %v1145 = vunpack.c.h.b16 %v913
        %v1146 = vunpack.c.l.b16 %v914
        %v1147 = vunpack.c.h.b16 %v914
        %v1148 = vunpack.c.l.b16 %v915
        %v1149 = vunpack.c.h.b16 %v915
        %v1150 = vunpack.c.l.b16 %v916
        %v1151 = vunpack.c.h.b16 %v916
        %v1152 = vunpack.c.l.b16 %v917
        %v1153 = vunpack.c.h.b16 %v917
        %v1154 = vunpack.c.l.b16 %v918
        %v1155 = vunpack.c.h.b16 %v918
        %v1156 = vunpack.c.l.b16 %v919
        %v1157 = vunpack.c.h.b16 %v919
        %v1158 = vunpack.c.l.b16 %v920
        %v1159 = vunpack.c.h.b16 %v920
        %v1160 = vunpack.c.l.b16 %v921
        %v1161 = vunpack.c.h.b16 %v921
        %v1162 = vunpack.c.l.b16 %v922
        %v1163 = vunpack.c.h.b16 %v922
        %v1164 = vunpack.c.l.b16 %v923
        %v1165 = vunpack.c.h.b16 %v923
        %v1166 = vunpack.c.l.b16 %v924
        %v1167 = vunpack.c.h.b16 %v924
        %v1168 = vunpack.c.l.b16 %v925
        %v1169 = vunpack.c.h.b16 %v925
        %v1170 = vunpack.c.l.b16 %v926
        %v1171 = vunpack.c.h.b16 %v926
        %v1172 = vunpack.c.l.b16 %v927
        %v1173 = vunpack.c.h.b16 %v927
        %v1174 = vunpack.c.l.b16 %v928
        %v1175 = vunpack.c.h.b16 %v928
        %v1176 = vunpack.c.l.b16 %v929
        %v1177 = vunpack.c.h.b16 %v929
        %v1178 = vunpack.c.l.b16 %v930
        %v1179 = vunpack.c.h.b16 %v930
        %v1180 = vunpack.c.l.b16 %v931
        %v1181 = vunpack.c.h.b16 %v931
        %v1182 = vunpack.c.l.b16 %v932
        %v1183 = vunpack.c.h.b16 %v932
        %v1184 = vunpack.c.l.b16 %v933
        %v1185 = vunpack.c.h.b16 %v933
        %v1186 = vunpack.c.l.b16 %v934
        %v1187 = vunpack.c.h.b16 %v934
        %v1188 = vunpack.c.l.b16 %v935
        %v1189 = vunpack.c.h.b16 %v935
        %v1190 = vunpack.c.l.b16 %v936
        %v1191 = vunpack.c.h.b16 %v936
        %v1192 = vunpack.c.l.b16 %v937
        %v1193 = vunpack.c.h.b16 %v937
        %v1194 = vunpack.c.l.b16 %v938
        %v1195 = vunpack.c.h.b16 %v938
        %v1196 = vunpack.c.l.b16 %v939
        %v1197 = vunpack.c.h.b16 %v939
        %v1198 = vunpack.c.l.b16 %v940
        %v1199 = vunpack.c.h.b16 %v940
        %v1200 = vunpack.c.l.b16 %v941
        %v1201 = vunpack.c.h.b16 %v941
        %v1202 = vunpack.c.l.b16 %v942
        %v1203 = vunpack.c.h.b16 %v942
        %v1204 = vunpack.c.l.b16 %v943
        %v1205 = vunpack.c.h.b16 %v943
        %v1206 = vunpack.c.l.b16 %v944
        %v1207 = vunpack.c.h.b16 %v944
        %v1208 = vunpack.c.l.b16 %v945
        %v1209 = vunpack.c.h.b16 %v945
        %v1210 = vunpack.c.l.b16 %v946
        %v1211 = vunpack.c.h.b16 %v946
        %v1212 = vunpack.c.l.b16 %v947
        %v1213 = vunpack.c.h.b16 %v947
        %v1214 = vunpack.c.l.b16 %v948
        %v1215 = vunpack.c.h.b16 %v948
        %v1216 = vunpack.c.l.b16 %v949
        %v1217 = vunpack.c.h.b16 %v949
        %v1218 = vunpack.c.l.b16 %v950
        %v1219 = vunpack.c.h.b16 %v950
        %v1220 = vunpack.c.l.b16 %v951
        %v1221 = vunpack.c.h.b16 %v951
        %v1222 = vunpack.c.l.b16 %v952
        %v1223 = vunpack.c.h.b16 %v952
        %v1224 = vunpack.c.l.b16 %v953
        %v1225 = vunpack.c.h.b16 %v953
        %v1226 = vunpack.c.l.b16 %v954
        %v1227 = vunpack.c.h.b16 %v954
        %v1228 = vunpack.c.l.b16 %v955
        %v1229 = vunpack.c.h.b16 %v955
        %v1230 = vunpack.c.l.b16 %v956
        %v1231 = vunpack.c.h.b16 %v956
        %v1232 = vunpack.c.l.b16 %v957
        %v1233 = vunpack.c.h.b16 %v957
        %v1234 = vunpack.c.l.b16 %v958
        %v1235 = vunpack.c.h.b16 %v958
        %v1236 = vunpack.c.l.b16 %v959
        %v1237 = vunpack.c.h.b16 %v959
        %v1238 = vunpack.c.l.b16 %v960
        %v1239 = vunpack.c.h.b16 %v960
        %v1240 = vunpack.c.l.b16 %v961
        %v1241 = vunpack.c.h.b16 %v961
        %v1242 = vunpack.c.l.b16 %v962
        %v1243 = vunpack.c.h.b16 %v962
        %v1244 = vunpack.c.l.b16 %v963
        %v1245 = vunpack.c.h.b16 %v963
        %v1246 = vunpack.c.l.b16 %v964
        %v1247 = vunpack.c.h.b16 %v964
        %v1248 = vunpack.c.l.b16 %v965
        %v1249 = vunpack.c.h.b16 %v965
        %v1250 = vunpack.c.l.b16 %v966
        %v1251 = vunpack.c.h.b16 %v966
        %v1252 = vunpack.c.l.b16 %v967
        %v1253 = vunpack.c.h.b16 %v967
        %v1254 = vunpack.c.l.b16 %v968
        %v1255 = vunpack.c.h.b16 %v968
        %v1256 = vunpack.c.l.b16 %v969
        %v1257 = vunpack.c.h.b16 %v969
        %v1258 = vunpack.c.l.b16 %v970
        %v1259 = vunpack.c.h.b16 %v970
        %v1260 = vunpack.c.l.b16 %v971
        %v1261 = vunpack.c.h.b16 %v971
        %v1262 = vunpack.c.l.b16 %v972
        %v1263 = vunpack.c.h.b16 %v972
        %v1264 = vunpack.c.l.b16 %v973
        %v1265 = vunpack.c.h.b16 %v973
        %v1266 = vunpack.c.l.b16 %v974
        %v1267 = vunpack.c.h.b16 %v974
        %v1268 = vunpack.c.l.b16 %v975
        %v1269 = vunpack.c.h.b16 %v975
        %v1270 = vunpack.c.l.b16 %v976
        %v1271 = vunpack.c.h.b16 %v976
        %v1272 = vunpack.c.l.b16 %v977
        %v1273 = vunpack.c.h.b16 %v977
        %v1274 = vunpack.c.l.b16 %v978
        %v1275 = vunpack.c.h.b16 %v978
        %v1276 = vunpack.c.l.b16 %v979
        %v1277 = vunpack.c.h.b16 %v979
        %v1278 = vunpack.c.l.b16 %v980
        %v1279 = vunpack.c.h.b16 %v980
        %v1280 = vunpack.c.l.b16 %v981
        %v1281 = vunpack.c.h.b16 %v981
        %v1282 = vunpack.c.l.b16 %v982
        %v1283 = vunpack.c.h.b16 %v982
        %v1284 = vunpack.c.l.b16 %v983
        %v1285 = vunpack.c.h.b16 %v983
        %v1286 = vunpack.c.l.b16 %v984
        %v1287 = vunpack.c.h.b16 %v984
        %v1288 = vunpack.c.l.b16 %v985
        %v1289 = vunpack.c.h.b16 %v985
        %v1290 = vunpack.c.l.b16 %v986
        %v1291 = vunpack.c.h.b16 %v986
        %v1292 = vunpack.c.l.b16 %v987
        %v1293 = vunpack.c.h.b16 %v987
        %v1294 = vunpack.c.l.b16 %v988
        %v1295 = vunpack.c.h.b16 %v988
        %v1296 = vunpack.c.l.b16 %v989
        %v1297 = vunpack.c.h.b16 %v989
        %v1298 = vunpack.c.l.b16 %v990
        %v1299 = vunpack.c.h.b16 %v990
        %v1300 = vunpack.c.l.b16 %v991
        %v1301 = vunpack.c.h.b16 %v991
        %v1302 = vunpack.c.l.b16 %v992
        %v1303 = vunpack.c.h.b16 %v992
        %v1304 = vunpack.c.l.b16 %v993
        %v1305 = vunpack.c.h.b16 %v993
        %v1306 = vunpack.c.l.b16 %v994
        %v1307 = vunpack.c.h.b16 %v994
        %v1308 = vunpack.c.l.b16 %v995
        %v1309 = vunpack.c.h.b16 %v995
        %v1310 = vunpack.c.l.b16 %v996
        %v1311 = vunpack.c.h.b16 %v996
        %v1312 = vunpack.c.l.b16 %v997
        %v1313 = vunpack.c.h.b16 %v997
        %v1314 = vunpack.c.l.b16 %v998
        %v1315 = vunpack.c.h.b16 %v998
        %v1316 = vunpack.c.l.b16 %v999
        %v1317 = vunpack.c.h.b16 %v999
        %v1318 = vunpack.c.l.b16 %v1000
        %v1319 = vunpack.c.h.b16 %v1000
        %v1320 = vunpack.c.l.b16 %v1001
        %v1321 = vunpack.c.h.b16 %v1001
        %v1322 = vpack.c.b16 %v1136, %v1130
        %v1323 = vpack.c.b16 %v1137, %v1131
        %v1324 = vpack.c.b16 %v1138, %v1132
        %v1325 = vpack.c.b16 %v1139, %v1133
        %v1326 = vpack.c.b16 %v1140, %v1134
        %v1327 = vpack.c.b16 %v1141, %v1135
        %v1328 = vpack.c.b16 %v1148, %v1142
        %v1329 = vpack.c.b16 %v1149, %v1143
        %v1330 = vpack.c.b16 %v1150, %v1144
        %v1331 = vpack.c.b16 %v1151, %v1145
        %v1332 = vpack.c.b16 %v1152, %v1146
        %v1333 = vpack.c.b16 %v1153, %v1147
        %v1334 = vpack.c.b16 %v1160, %v1154
        %v1335 = vpack.c.b16 %v1161, %v1155
        %v1336 = vpack.c.b16 %v1162, %v1156
        %v1337 = vpack.c.b16 %v1163, %v1157
        %v1338 = vpack.c.b16 %v1164, %v1158
        %v1339 = vpack.c.b16 %v1165, %v1159
        %v1340 = vpack.c.b16 %v1172, %v1166
        %v1341 = vpack.c.b16 %v1173, %v1167
        %v1342 = vpack.c.b16 %v1174, %v1168
        %v1343 = vpack.c.b16 %v1175, %v1169
        %v1344 = vpack.c.b16 %v1176, %v1170
        %v1345 = vpack.c.b16 %v1177, %v1171
        %v1346 = vpack.c.b16 %v1184, %v1178
        %v1347 = vpack.c.b16 %v1185, %v1179
        %v1348 = vpack.c.b16 %v1186, %v1180
        %v1349 = vpack.c.b16 %v1187, %v1181
        %v1350 = vpack.c.b16 %v1188, %v1182
        %v1351 = vpack.c.b16 %v1189, %v1183
        %v1352 = vpack.c.b16 %v1196, %v1190
        %v1353 = vpack.c.b16 %v1197, %v1191
        %v1354 = vpack.c.b16 %v1198, %v1192
        %v1355 = vpack.c.b16 %v1199, %v1193
        %v1356 = vpack.c.b16 %v1200, %v1194
        %v1357 = vpack.c.b16 %v1201, %v1195
        %v1358 = vpack.c.b16 %v1208, %v1202
        %v1359 = vpack.c.b16 %v1209, %v1203
        %v1360 = vpack.c.b16 %v1210, %v1204
        %v1361 = vpack.c.b16 %v1211, %v1205
        %v1362 = vpack.c.b16 %v1212, %v1206
        %v1363 = vpack.c.b16 %v1213, %v1207
        %v1364 = vpack.c.b16 %v1220, %v1214
        %v1365 = vpack.c.b16 %v1221, %v1215
        %v1366 = vpack.c.b16 %v1222, %v1216
        %v1367 = vpack.c.b16 %v1223, %v1217
        %v1368 = vpack.c.b16 %v1224, %v1218
        %v1369 = vpack.c.b16 %v1225, %v1219
        %v1370 = vpack.c.b16 %v1232, %v1226
        %v1371 = vpack.c.b16 %v1233, %v1227
        %v1372 = vpack.c.b16 %v1234, %v1228
        %v1373 = vpack.c.b16 %v1235, %v1229
        %v1374 = vpack.c.b16 %v1236, %v1230
        %v1375 = vpack.c.b16 %v1237, %v1231
        %v1376 = vpack.c.b16 %v1244, %v1238
        %v1377 = vpack.c.b16 %v1245, %v1239
        %v1378 = vpack.c.b16 %v1246, %v1240
        %v1379 = vpack.c.b16 %v1247, %v1241
        %v1380 = vpack.c.b16 %v1248, %v1242
        %v1381 = vpack.c.b16 %v1249, %v1243
        %v1382 = vpack.c.b16 %v1256, %v1250
        %v1383 = vpack.c.b16 %v1257, %v1251
        %v1384 = vpack.c.b16 %v1258, %v1252
        %v1385 = vpack.c.b16 %v1259, %v1253
        %v1386 = vpack.c.b16 %v1260, %v1254
        %v1387 = vpack.c.b16 %v1261, %v1255
        %v1388 = vpack.c.b16 %v1268, %v1262
        %v1389 = vpack.c.b16 %v1269, %v1263
        %v1390 = vpack.c.b16 %v1270, %v1264
        %v1391 = vpack.c.b16 %v1271, %v1265
        %v1392 = vpack.c.b16 %v1272, %v1266
        %v1393 = vpack.c.b16 %v1273, %v1267
        %v1394 = vpack.c.b16 %v1280, %v1274
        %v1395 = vpack.c.b16 %v1281, %v1275
        %v1396 = vpack.c.b16 %v1282, %v1276
        %v1397 = vpack.c.b16 %v1283, %v1277
        %v1398 = vpack.c.b16 %v1284, %v1278
        %v1399 = vpack.c.b16 %v1285, %v1279
        %v1400 = vpack.c.b16 %v1292, %v1286
        %v1401 = vpack.c.b16 %v1293, %v1287
        %v1402 = vpack.c.b16 %v1294, %v1288
        %v1403 = vpack.c.b16 %v1295, %v1289
        %v1404 = vpack.c.b16 %v1296, %v1290
        %v1405 = vpack.c.b16 %v1297, %v1291
        %v1406 = vpack.c.b16 %v1304, %v1298
        %v1407 = vpack.c.b16 %v1305, %v1299
        %v1408 = vpack.c.b16 %v1306, %v1300
        %v1409 = vpack.c.b16 %v1307, %v1301
        %v1410 = vpack.c.b16 %v1308, %v1302
        %v1411 = vpack.c.b16 %v1309, %v1303
        %v1412 = vpack.c.b16 %v1316, %v1310
        %v1413 = vpack.c.b16 %v1317, %v1311
        %v1414 = vpack.c.b16 %v1318, %v1312
        %v1415 = vpack.c.b16 %v1319, %v1313
        %v1416 = vpack.c.b16 %v1320, %v1314
        %v1417 = vpack.c.b16 %v1321, %v1315
        %1514 = vmatprep.subr.bf16.mxu0 %v1323
        %1515 = vmatpush1.bf16.msra.mxu0 %v1322
        %1516 = vmatprep.subr.bf16.mxu0 %v1329
        %1517 = vmatpush1.bf16.msra.mxu0 %v1328
        %1518 = vmatprep.subr.bf16.mxu0 %v1335
        %1519 = vmatpush1.bf16.msra.mxu0 %v1334
        %1520 = vmatprep.subr.bf16.mxu0 %v1341
        %1521 = vmatpush1.bf16.msra.mxu0 %v1340
        %1522 = vmatprep.subr.bf16.mxu0 %v1347
        %1523 = vmatpush1.bf16.msra.mxu0 %v1346
        %1524 = vmatprep.subr.bf16.mxu0 %v1353
        %1525 = vmatpush1.bf16.msra.mxu0 %v1352
        %1526 = vmatprep.subr.bf16.mxu0 %v1359
        %1527 = vmatpush1.bf16.msra.mxu0 %v1358
        %1528 = vmatprep.subr.bf16.mxu0 %v1365
        %1529 = vmatpush1.bf16.msra.mxu0 %v1364
        %1530 = vmatprep.subr.bf16.mxu0 %v1371
        %1531 = vmatpush1.bf16.msra.mxu0 %v1370
        %1532 = vmatprep.subr.bf16.mxu0 %v1377
        %1533 = vmatpush1.bf16.msra.mxu0 %v1376
        %1534 = vmatprep.subr.bf16.mxu0 %v1383
        %1535 = vmatpush1.bf16.msra.mxu0 %v1382
        %1536 = vmatprep.subr.bf16.mxu0 %v1389
        %1537 = vmatpush1.bf16.msra.mxu0 %v1388
        %1538 = vmatprep.subr.bf16.mxu0 %v1395
        %1539 = vmatpush1.bf16.msra.mxu0 %v1394
        %1540 = vmatprep.subr.bf16.mxu0 %v1401
        %1541 = vmatpush1.bf16.msra.mxu0 %v1400
        %1542 = vmatprep.subr.bf16.mxu0 %v1407
        %1543 = vmatpush1.bf16.msra.mxu0 %v1406
        %1544 = vmatprep.subr.bf16.mxu0 %v1413
        %1545 = vmatpush1.bf16.msra.mxu0 %v1412
        %1546 = vmatprep.mubr.bf16.mxu0 %v903
        %1547 = vmatmul.mubr.bf16.gmra.mrb[0].mxu0 %v902
        %v1548 = vpop.f32.mrb[0].mxu0
        %v1549 = vadd.f32 %v1007, %v1548
        %v1550 = vpop.f32.mrb[0].mxu0
        %v1551 = vadd.f32 %v1011, %v1550
        %v1552 = vpop.f32.mrb[0].mxu0
        %v1553 = vadd.f32 %v1007, %v1552
        %v1554 = vpop.f32.mrb[0].mxu0
        %v1555 = vadd.f32 %v1011, %v1554
        %1556 = vmatprep.mubr.bf16.mxu0 %v905
        %1557 = vmatmul.mubr.bf16.gmra.mrb[0].mxu0 %v904
        %v1558 = vpop.f32.mrb[0].mxu0
        %v1559 = vadd.f32 %v1007, %v1558
        %v1560 = vpop.f32.mrb[0].mxu0
        %v1561 = vadd.f32 %v1011, %v1560
        %v1562 = vpop.f32.mrb[0].mxu0
        %v1563 = vadd.f32 %v1007, %v1562
        %v1564 = vpop.f32.mrb[0].mxu0
        %v1565 = vadd.f32 %v1011, %v1564
        %1566 = vdwg.mxu0
        %1567 = vmatprep.subr.bf16.mxu0 %v1325
        %1568 = vmatpush1.bf16.msra.mxu0 %v1324
        %1569 = vmatprep.subr.bf16.mxu0 %v1331
        %1570 = vmatpush1.bf16.msra.mxu0 %v1330
        %1571 = vmatprep.subr.bf16.mxu0 %v1337
        %1572 = vmatpush1.bf16.msra.mxu0 %v1336
        %1573 = vmatprep.subr.bf16.mxu0 %v1343
        %1574 = vmatpush1.bf16.msra.mxu0 %v1342
        %1575 = vmatprep.subr.bf16.mxu0 %v1349
        %1576 = vmatpush1.bf16.msra.mxu0 %v1348
        %1577 = vmatprep.subr.bf16.mxu0 %v1355
        %1578 = vmatpush1.bf16.msra.mxu0 %v1354
        %1579 = vmatprep.subr.bf16.mxu0 %v1361
        %1580 = vmatpush1.bf16.msra.mxu0 %v1360
        %1581 = vmatprep.subr.bf16.mxu0 %v1367
        %1582 = vmatpush1.bf16.msra.mxu0 %v1366
        %1583 = vmatprep.subr.bf16.mxu0 %v1373
        %1584 = vmatpush1.bf16.msra.mxu0 %v1372
        %1585 = vmatprep.subr.bf16.mxu0 %v1379
        %1586 = vmatpush1.bf16.msra.mxu0 %v1378
        %1587 = vmatprep.subr.bf16.mxu0 %v1385
        %1588 = vmatpush1.bf16.msra.mxu0 %v1384
        %1589 = vmatprep.subr.bf16.mxu0 %v1391
        %1590 = vmatpush1.bf16.msra.mxu0 %v1390
        %1591 = vmatprep.subr.bf16.mxu0 %v1397
        %1592 = vmatpush1.bf16.msra.mxu0 %v1396
        %1593 = vmatprep.subr.bf16.mxu0 %v1403
        %1594 = vmatpush1.bf16.msra.mxu0 %v1402
        %1595 = vmatprep.subr.bf16.mxu0 %v1409
        %1596 = vmatpush1.bf16.msra.mxu0 %v1408
        %1597 = vmatprep.subr.bf16.mxu0 %v1415
        %1598 = vmatpush1.bf16.msra.mxu0 %v1414
        %1599 = vmatprep.mubr.bf16.mxu0 %v903
        %1600 = vmatmul.mubr.bf16.gmra.mrb[0].mxu0 %v902
        %v1601 = vpop.f32.mrb[0].mxu0
        %v1602 = vadd.f32 %v1015, %v1601
        %v1603 = vpop.f32.mrb[0].mxu0
        %v1604 = vadd.f32 %v1019, %v1603
        %v1605 = vpop.f32.mrb[0].mxu0
        %v1606 = vadd.f32 %v1015, %v1605
        %v1607 = vpop.f32.mrb[0].mxu0
        %v1608 = vadd.f32 %v1019, %v1607
        %1609 = vmatprep.mubr.bf16.mxu0 %v905
        %1610 = vmatmul.mubr.bf16.gmra.mrb[0].mxu0 %v904
        %v1611 = vpop.f32.mrb[0].mxu0
        %v1612 = vadd.f32 %v1015, %v1611
        %v1613 = vpop.f32.mrb[0].mxu0
        %v1614 = vadd.f32 %v1019, %v1613
        %v1615 = vpop.f32.mrb[0].mxu0
        %v1616 = vadd.f32 %v1015, %v1615
        %v1617 = vpop.f32.mrb[0].mxu0
        %v1618 = vadd.f32 %v1019, %v1617
        %1619 = vdwg.mxu0
        %1620 = vmatprep.subr.bf16.mxu0 %v1327
        %1621 = vmatpush1.bf16.msra.mxu0 %v1326
        %1622 = vmatprep.subr.bf16.mxu0 %v1333
        %1623 = vmatpush1.bf16.msra.mxu0 %v1332
        %1624 = vmatprep.subr.bf16.mxu0 %v1339
        %1625 = vmatpush1.bf16.msra.mxu0 %v1338
        %1626 = vmatprep.subr.bf16.mxu0 %v1345
        %1627 = vmatpush1.bf16.msra.mxu0 %v1344
        %1628 = vmatprep.subr.bf16.mxu0 %v1351
        %1629 = vmatpush1.bf16.msra.mxu0 %v1350
        %1630 = vmatprep.subr.bf16.mxu0 %v1357
        %1631 = vmatpush1.bf16.msra.mxu0 %v1356
        %1632 = vmatprep.subr.bf16.mxu0 %v1363
        %1633 = vmatpush1.bf16.msra.mxu0 %v1362
        %1634 = vmatprep.subr.bf16.mxu0 %v1369
        %1635 = vmatpush1.bf16.msra.mxu0 %v1368
        %1636 = vmatprep.subr.bf16.mxu0 %v1375
        %1637 = vmatpush1.bf16.msra.mxu0 %v1374
        %1638 = vmatprep.subr.bf16.mxu0 %v1381
        %1639 = vmatpush1.bf16.msra.mxu0 %v1380
        %1640 = vmatprep.subr.bf16.mxu0 %v1387
        %1641 = vmatpush1.bf16.msra.mxu0 %v1386
        %1642 = vmatprep.subr.bf16.mxu0 %v1393
        %1643 = vmatpush1.bf16.msra.mxu0 %v1392
        %1644 = vmatprep.subr.bf16.mxu0 %v1399
        %1645 = vmatpush1.bf16.msra.mxu0 %v1398
        %1646 = vmatprep.subr.bf16.mxu0 %v1405
        %1647 = vmatpush1.bf16.msra.mxu0 %v1404
        %1648 = vmatprep.subr.bf16.mxu0 %v1411
        %1649 = vmatpush1.bf16.msra.mxu0 %v1410
        %1650 = vmatprep.subr.bf16.mxu0 %v1417
        %1651 = vmatpush1.bf16.msra.mxu0 %v1416
        %1652 = vmatprep.mubr.bf16.mxu0 %v903
        %1653 = vmatmul.mubr.bf16.gmra.mrb[0].mxu0 %v902
        %v1654 = vpop.f32.mrb[0].mxu0
        %v1655 = vadd.f32 %v1023, %v1654
        %v1656 = vpop.f32.mrb[0].mxu0
        %v1657 = vadd.f32 %v1027, %v1656
        %v1658 = vpop.f32.mrb[0].mxu0
        %v1659 = vadd.f32 %v1023, %v1658
        %v1660 = vpop.f32.mrb[0].mxu0
        %v1661 = vadd.f32 %v1027, %v1660
        %1662 = vmatprep.mubr.bf16.mxu0 %v905
        %1663 = vmatmul.mubr.bf16.gmra.mrb[0].mxu0 %v904
        %v1664 = vpop.f32.mrb[0].mxu0
        %v1665 = vadd.f32 %v1023, %v1664
        %v1666 = vpop.f32.mrb[0].mxu0
        %v1667 = vadd.f32 %v1027, %v1666
        %v1668 = vpop.f32.mrb[0].mxu0
        %v1669 = vadd.f32 %v1023, %v1668
        %v1670 = vpop.f32.mrb[0].mxu0
        %v1671 = vadd.f32 %v1027, %v1670
        %1672 = vdwg.mxu0
        %1673 = vst [vmem:[%s341] sm:$0xff] %v1549
        %1674 = vst [vmem:[%s341 + $0x8] sm:$0xff] %v1551
        %1675 = vst [vmem:[%s341 + $0x10] sm:$0xff] %v1602
        %1676 = vst [vmem:[%s341 + $0x18] sm:$0xff] %v1604
        %1677 = vst [vmem:[%s341 + $0x20] sm:$0xff] %v1655
        %1678 = vst [vmem:[%s341 + $0x28] sm:$0xff] %v1657
        %1679 = vst [vmem:[%s341 + $0x30] sm:$0xff] %v1553
        %1680 = vst [vmem:[%s341 + $0x38] sm:$0xff] %v1555
        %1681 = vst [vmem:[%s341 + $0x40] sm:$0xff] %v1606
        %1682 = vst [vmem:[%s341 + $0x48] sm:$0xff] %v1608
        %1683 = vst [vmem:[%s341 + $0x50] sm:$0xff] %v1659
        %1684 = vst [vmem:[%s341 + $0x58] sm:$0xff] %v1661
        %1685 = vst [vmem:[%s341 + $0x60] sm:$0xff] %v1559
        %1686 = vst [vmem:[%s341 + $0x68] sm:$0xff] %v1561
        %1687 = vst [vmem:[%s341 + $0x70] sm:$0xff] %v1612
        %1688 = vst [vmem:[%s341 + $0x78] sm:$0xff] %v1614
        %1689 = vst [vmem:[%s341 + $0x80] sm:$0xff] %v1665
        %1690 = vst [vmem:[%s341 + $0x88] sm:$0xff] %v1667
        %1691 = vst [vmem:[%s341 + $0x90] sm:$0xff] %v1563
        %1692 = vst [vmem:[%s341 + $0x98] sm:$0xff] %v1565
        %1693 = vst [vmem:[%s341 + $0xa0] sm:$0xff] %v1616
        %1694 = vst [vmem:[%s341 + $0xa8] sm:$0xff] %v1618
        %1695 = vst [vmem:[%s341 + $0xb0] sm:$0xff] %v1669
        %1696 = vst [vmem:[%s341 + $0xb8] sm:$0xff] %v1671
        %s1697 = sand.u32 %s186, 1
        %s1698 = scalar_lea.sflag [#allocation4], %s1697
        %s1699 = sand.u32 %s186, 1
        %s1700 = smul.addr %s1699, 192
        %s1701 = scalar_lea.vmem [#allocation10], %s1700
        // Predicated region
        $region65: #{tpu_custom_call.1} parent=47 // pred_check
          %p1702 = pneg %p196
        $region66: #{tpu_custom_call.1} parent=47 // pred_check_branch
          %1704 = sbr.rel (%p1702) target = $region68
        $region67: #{tpu_custom_call.1} parent=47 // pred_region
          %s1705 = smul.u32 4, %s26
          %s1707 = ssub.s32 3072, 3072
          %1708 = vsyncadd %s1698, %s1707
          %s1709 = smul.addr %s1705, 6
          %s1710 = smul.addr %s1709, 128
          %s1711 = scalar_lea.hbm %s7, %s1710
          %s1712 = sshll.u32 %s1701, 4
          %s1713 = int_to_ptr.vmem [resolvable:$true] %s1712
          %1718 = dma.vmem_to_hbm [thread:$0]  %s1713, 3072, %s1711, %s1698, 768, 768, 48
        $region68: #{tpu_custom_call.1} parent=47 // pred_fallthru
          _
      $region48: #{tpu_custom_call.1} parent=5 // pred_fallthru
        _
      %p1719 = scmp.le.s32.totalorder 2, %s21
      // Predicated region
      $region69: #{tpu_custom_call.1} parent=5 // pred_check
        %p1720 = pneg %p1719
      $region70: #{tpu_custom_call.1} parent=5 // pred_check_branch
        %1722 = sbr.rel (%p1720) target = $region72
      $region71: #{tpu_custom_call.1} parent=5 // pred_region
        %s1723 = ssub.s32 %s21, 2
        // Predicated region
        $region73: #{tpu_custom_call.1} parent=71 // pred_check
          %p1724 = pneg %p202
        $region74: #{tpu_custom_call.1} parent=71 // pred_check_branch
          %1726 = sbr.rel (%p1724) target = $region76
        $region75: #{tpu_custom_call.1} parent=71 // pred_region
          %s1727 = sand.u32 %s187, 1
          %s1728 = scalar_lea.sflag [#allocation4], %s1727
          %s1729 = sand.u32 %s187, 1
          %s1730 = smul.addr %s1729, 192
          %s1731 = scalar_lea.vmem [#allocation10], %s1730
          %1732 = dma.done %s1728, 3072
        $region76: #{tpu_custom_call.1} parent=71 // pred_fallthru
          _
      $region72: #{tpu_custom_call.1} parent=5 // pred_fallthru
        _
    $region6: #{tpu_custom_call.1} parent=1 // loop_footer
      %s25 = sadd.s32 1, %s21
    $region7: #{tpu_custom_call.1} parent=1 // loop_footer_branch
      %20 = sbr.rel target = $region3
    $region8: #{tpu_custom_call.1} parent=1 // loop_exit
      _
    %1733 = vsyncpa [#allocation3], 1
    %s1734 = scalar_lea.sflag [#allocation3], 1
    %1735 = vsyncpa %s1734, 1
    %1736 = vsyncpa [#allocation6], 1
    %1737 = vsyncpa [#allocation9], 1
    %1738 = vsyncpa [#allocation4], 1
    %s1739 = scalar_lea.sflag [#allocation4], 1
    %1740 = vsyncpa %s1739, 1

</llo_original>
